<compile_context>
chip_gen: v6e
topology: v6e:2x2x1
jax: 0.10.0
libtpu: 0.0.40
codegen_flags: <defaults>
</compile_context>

<pallas_src>
import functools
import math

import jax
import jax.numpy as jnp
from jax.experimental import pallas as pl
from jax.experimental.pallas import tpu as pltpu


def _round_up(x, m):
    return (x + m - 1) // m * m


def _silu(x):
    return x * jax.nn.sigmoid(x)


def egcl_v2a_kernel(
    ids_ref, nf_ref, cd_ref, vt_ref,
    w1a_ref, w1c_ref, b1_ref, w2_ref, b2_ref,
    wc1_ref, bc1_ref, wc2_ref,
    w3_ref, b3_ref, w4_ref, b4_ref,
    node_out_ref, coord_out_ref,
    *, C: int,
):
    TN, HP = nf_ref.shape
    BP = vt_ref.shape[0]
    CW = vt_ref.shape[1] // C                 # per-channel table width (HP + 128)
    cdt = w1a_ref.dtype                       # MXU operand dtype (f32 or bf16)

    ids = ids_ref[...]                        # [TN, 1] int32 graph ids
    nf = nf_ref[...]                          # [TN, HP] f32
    cd = cd_ref[...]                          # [TN, 3]  f32

    # ---- in-kernel gather of the (resident, W1b-pre-projected) virtual tables
    #      via a single small-K one-hot matmul (arbitrary non-contiguous batches).
    onehot = (ids == jax.lax.broadcasted_iota(jnp.int32, (TN, BP), 1)
              ).astype(jnp.float32)                                   # [TN, BP]
    g = jnp.dot(onehot, vt_ref[...],
                preferred_element_type=jnp.float32)                   # [TN, C*CW]

    # per-channel slices: [:, :HP] = feat_V @ W1b ;  [:, HP:HP+3] = virtual coord
    z3 = jnp.stack([g[:, c * CW: c * CW + HP] for c in range(C)], axis=0)      # [C,TN,HP]
    vc3 = jnp.stack([g[:, c * CW + HP: c * CW + HP + 3] for c in range(C)], 0)  # [C,TN,3]

    diff3 = vc3 - cd[None]                                            # virtual_coord_diff
    radial3 = jnp.sqrt(jnp.sum(diff3 * diff3, axis=-1, keepdims=True))  # [C,TN,1]

    # ---- edge_mlp, channel-batched (M = C*TN).  Shared node-feature term
    #      (nf @ w1a + b1) computed once and broadcast over channels.
    base = (jnp.dot(nf.astype(cdt), w1a_ref[...],
                    preferred_element_type=jnp.float32) + b1_ref[...])        # [TN, HP]
    h1 = _silu(z3 + radial3 * w1c_ref[...] + base[None]).reshape(C * TN, HP)
    edge = _silu(jnp.dot(h1.astype(cdt), w2_ref[...],
                         preferred_element_type=jnp.float32) + b2_ref[...])   # [C*TN, HP]

    # ---- coord_mlp: Linear+SiLU, then H->1 as VPU multiply + lane reduce
    c1 = _silu(jnp.dot(edge.astype(cdt), wc1_ref[...],
                       preferred_element_type=jnp.float32) + bc1_ref[...])
    score3 = jnp.sum(c1 * wc2_ref[...], axis=-1, keepdims=True
                     ).reshape(C, TN, 1)                                      # [C,TN,1]

    inv_c = 1.0 / C
    coord_out_ref[...] = cd + jnp.sum(-diff3 * score3, axis=0) * inv_c        # [TN, 3]

    # ---- node_mlp on cat([node_feat, mean_c(edge)]) (fused K = 2*HP) + residual
    edge_mean = jnp.sum(edge.reshape(C, TN, HP), axis=0) * inv_c              # [TN, HP]
    agg = jnp.concatenate([nf, edge_mean], axis=-1)                           # [TN, 2*HP]
    n1 = _silu(jnp.dot(agg.astype(cdt), w3_ref[...],
                       preferred_element_type=jnp.float32) + b3_ref[...])
    node_out_ref[...] = (nf
                         + jnp.dot(n1.astype(cdt), w4_ref[...],
                                   preferred_element_type=jnp.float32)
                         + b4_ref[...])


def egcl_v2a_forward(params, virtual_node_feat, virtual_coord, node_feat, coord,
                     data_batch, *, tile_n=256, compute_dtype=jnp.float32):
    """virtual_node_feat: [B, H, C], virtual_coord: [B, 3, C],
       node_feat: [N, H], coord: [N, 3], data_batch: [N] int (graph id per node)."""
    N, H = node_feat.shape
    B, _, C = virtual_node_feat.shape
    f32 = jnp.float32

    HP = _round_up(max(H, 128), 128)           # lane-dense hidden dim
    BP = _round_up(max(B, 8), 8)               # one-hot / table row dim (small K)
    CW = HP + 128                              # per-channel table width (feat | coord)
    # TODO(synk): for B >> a few hundred graphs the one-hot gather K grows; switch
    #             to scalar-prefetch indexed BlockSpecs (segment-contiguous batches)
    #             or a manual DMA gather instead.
    TN = _round_up(min(tile_n, _round_up(N, 8)), 8)
    Np = _round_up(N, TN)

    def pad2(x, r, c):
        x = x.astype(f32)
        return jnp.pad(x, ((0, r - x.shape[0]), (0, c - x.shape[1])))

    cdt = compute_dtype
    w1a = pad2(params["w1a"], HP, HP).astype(cdt)
    w1c = pad2(params["w1c"], 1, HP)
    b1 = pad2(params["b1"], 1, HP)
    w2 = pad2(params["w2"], HP, HP).astype(cdt)
    b2 = pad2(params["b2"], 1, HP)
    wc1 = pad2(params["wc1"], HP, HP).astype(cdt)
    bc1 = pad2(params["bc1"], 1, HP)
    wc2r = pad2(params["wc2"].T, 1, HP)                       # [1, HP] row
    # node_mlp layer 1, K-fused over [node_feat(HP) | edge_mean(HP)]
    w3 = jnp.zeros((2 * HP, HP), f32)
    w3 = w3.at[:H, :H].set(params["w3a"].astype(f32))
    w3 = w3.at[HP:HP + H, :H].set(params["w3b"].astype(f32))
    w3 = w3.astype(cdt)
    b3 = pad2(params["b3"], 1, HP)
    w4 = pad2(params["w4"], HP, HP).astype(cdt)
    b4 = pad2(params["b4"], 1, HP)

    # Combined resident virtual table, pre-projected by W1b (project-then-gather
    # == gather-then-project since the gather is a pure row selection):
    #   vt[b, c*CW : c*CW+H]      = virtual_node_feat[b, :, c] @ W1b
    #   vt[b, c*CW+HP : c*CW+HP+3] = virtual_coord[b, :, c]
    proj = jnp.einsum("bhc,hk->cbk", virtual_node_feat.astype(f32),
                      params["w1b"].astype(f32))               # [C, B, H]
    vt3 = jnp.zeros((C, BP, CW), f32)
    vt3 = vt3.at[:, :B, :H].set(proj)
    vt3 = vt3.at[:, :B, HP:HP + 3].set(
        jnp.transpose(virtual_coord.astype(f32), (2, 0, 1)))   # [C, B, 3]
    vt = jnp.transpose(vt3, (1, 0, 2)).reshape(BP, C * CW)     # [BP, C*CW]

    nf_p = jnp.pad(node_feat.astype(f32), ((0, Np - N), (0, HP - H)))
    cd_p = jnp.pad(coord.astype(f32), ((0, Np - N), (0, 0)))
    ids_p = jnp.pad(data_batch.astype(jnp.int32), (0, Np - N)).reshape(Np, 1)

    grid = (Np // TN,)
    tiled = lambda bs: pl.BlockSpec(bs, lambda i: (i, 0))
    res2 = lambda bs: pl.BlockSpec(bs, lambda i: (0, 0))

    in_specs = [
        tiled((TN, 1)),                 # graph ids
        tiled((TN, HP)),                # node_feat
        tiled((TN, 3)),                 # coord
        res2((BP, C * CW)),             # combined virtual table (resident)
        res2((HP, HP)), res2((1, HP)), res2((1, HP)),   # w1a w1c b1
        res2((HP, HP)), res2((1, HP)),                  # w2 b2
        res2((HP, HP)), res2((1, HP)), res2((1, HP)),   # wc1 bc1 wc2
        res2((2 * HP, HP)), res2((1, HP)),              # w3 b3
        res2((HP, HP)), res2((1, HP)),                  # w4 b4
    ]
    out_specs = (tiled((TN, HP)), tiled((TN, 3)))

    cost = pl.CostEstimate(
        flops=int(2 * Np * (HP * HP * (4 + 2 * C) + BP * C * CW)),
        transcendentals=int(Np * HP * (3 * C + 1)),
        bytes_accessed=int(4 * (Np * (2 * HP + 8) + BP * C * CW + 8 * HP * HP)),
    )

    node_out_p, coord_out_p = pl.pallas_call(
        functools.partial(egcl_v2a_kernel, C=C),
        grid=grid,
        in_specs=in_specs,
        out_specs=out_specs,
        out_shape=(jax.ShapeDtypeStruct((Np, HP), f32),
                   jax.ShapeDtypeStruct((Np, 3), f32)),
        compiler_params=pltpu.CompilerParams(
            dimension_semantics=("parallel",),
            vmem_limit_bytes=32 * 1024 * 1024),
        cost_estimate=cost,
    )(ids_p, nf_p, cd_p, vt,
      w1a, w1c, b1, w2, b2, wc1, bc1, wc2r, w3, b3, w4, b4)

    return node_out_p[:N, :H], coord_out_p[:N, :3]


def init_params(key, H):
    ks = jax.random.split(key, 14)
    u = lambda k, shape, s: jax.random.uniform(k, shape, jnp.float32, -s, s)
    s_e = 1.0 / math.sqrt(2 * H + 1)        # edge_mlp layer-1 fan-in
    s_h = 1.0 / math.sqrt(H)
    s_n = 1.0 / math.sqrt(2 * H)            # node_mlp layer-1 fan-in
    s_x = 0.001 * math.sqrt(6.0 / (H + 1))  # xavier_uniform, gain=0.001
    return {
        # edge_mlp layer 1, split by input block: [feat_R | feat_V | radial]
        "w1a": u(ks[0], (H, H), s_e), "w1b": u(ks[1], (H, H), s_e),
        "w1c": u(ks[2], (1, H), s_e), "b1": u(ks[3], (1, H), s_e),
        "w2": u(ks[4], (H, H), s_h), "b2": u(ks[5], (1, H), s_h),
        # coord_mlp
        "wc1": u(ks[6], (H, H), s_h), "bc1": u(ks[7], (1, H), s_h),
        "wc2": u(ks[8], (H, 1), s_x),
        # node_mlp layer 1, split by input block: [node_feat | mean(edge_feat)]
        "w3a": u(ks[9], (H, H), s_n), "w3b": u(ks[10], (H, H), s_n),
        "b3": u(ks[11], (1, H), s_n),
        "w4": u(ks[12], (H, H), s_h), "b4": u(ks[13], (1, H), s_h),
    }


def egcl_v2a_reference(params, virtual_node_feat, virtual_coord, node_feat, coord,
                       data_batch):
    """Pure-JAX mirror of the PyTorch forward (same [N, feat, C] conventions)."""
    C = virtual_node_feat.shape[-1]
    diff = virtual_coord[data_batch] - coord[..., None]                   # [N,3,C]
    radial = jnp.sqrt(jnp.sum(diff * diff, axis=1, keepdims=True))        # [N,1,C]
    feat_R = jnp.repeat(node_feat[..., None], C, axis=-1)                 # [N,H,C]
    feat_V = virtual_node_feat[data_batch]                                # [N,H,C]
    edge_in = jnp.concatenate([feat_R, feat_V, radial], axis=1)           # [N,2H+1,C]
    x = jnp.transpose(edge_in, (0, 2, 1))                                 # [N,C,2H+1]
    W1 = jnp.concatenate([params["w1a"], params["w1b"], params["w1c"]], axis=0)
    h1 = jax.nn.silu(x @ W1 + params["b1"])
    edge = jax.nn.silu(h1 @ params["w2"] + params["b2"])                  # [N,C,H]
    c1 = jax.nn.silu(edge @ params["wc1"] + params["bc1"])
    score = c1 @ params["wc2"]                                            # [N,C,1]
    trans = jnp.mean(-diff * jnp.transpose(score, (0, 2, 1)), axis=-1)    # [N,3]
    coord_out = coord + trans
    edge_mean = jnp.mean(jnp.transpose(edge, (0, 2, 1)), axis=-1)         # [N,H]
    W3 = jnp.concatenate([params["w3a"], params["w3b"]], axis=0)
    agg = jnp.concatenate([node_feat, edge_mean], axis=1)
    n1 = jax.nn.silu(agg @ W3 + params["b3"])
    node_out = node_feat + (n1 @ params["w4"] + params["b4"])
    return node_out, coord_out


if __name__ == "__main__":
    key = jax.random.PRNGKey(0)
    N, H, C, B = 50, 32, 4, 2     # nodes, hidden dim, virtual channels, graphs

    k = jax.random.split(key, 5)
    node_feat = jax.random.normal(k[0], (N, H), jnp.float32)
    coord = jax.random.normal(k[1], (N, 3), jnp.float32)
    virtual_node_feat = jax.random.normal(k[2], (B, H, C), jnp.float32)
    virtual_coord = jax.random.normal(k[3], (B, 3, C), jnp.float32)
    data_batch = (jnp.arange(N) % B).astype(jnp.int32)   # deliberately non-contiguous
    params = init_params(k[4], H)

    ref_n, ref_c = egcl_v2a_reference(
        params, virtual_node_feat, virtual_coord, node_feat, coord, data_batch)

    # f32 compute path (tight tolerance); small tile so the grid has several steps.
    fwd = jax.jit(functools.partial(egcl_v2a_forward, tile_n=16))
    node_out, coord_out = fwd(params, virtual_node_feat, virtual_coord,
                              node_feat, coord, data_batch)
    jax.block_until_ready((node_out, coord_out))
    assert node_out.shape == (N, H) and coord_out.shape == (N, 3)
    assert jnp.allclose(node_out, ref_n, atol=1e-4, rtol=1e-4)
    assert jnp.allclose(coord_out, ref_c, atol=1e-4, rtol=1e-4)

    # bf16 MXU-operand path (f32 accumulation / activations) — loose tolerance.
    fwd_bf16 = jax.jit(functools.partial(egcl_v2a_forward, tile_n=16,
                                         compute_dtype=jnp.bfloat16))
    node_bf, coord_bf = fwd_bf16(params, virtual_node_feat, virtual_coord,
                                 node_feat, coord, data_batch)
    jax.block_until_ready((node_bf, coord_bf))
    assert jnp.allclose(node_bf, ref_n, atol=2e-1, rtol=1e-1)
    assert jnp.allclose(coord_bf, ref_c, atol=2e-2, rtol=1e-1)

    print("KERNEL_OK")
</pallas_src>

<mosaic_0001>
module attributes {stable_mosaic.version = 11 : i64} {
  func.func @egcl_v2a_kernel(%arg0: i32, %arg1: memref<16x1xi32, #tpu.memory_space<vmem>>, %arg2: memref<16x128xf32, #tpu.memory_space<vmem>>, %arg3: memref<16x3xf32, #tpu.memory_space<vmem>>, %arg4: memref<8x1024xf32, #tpu.memory_space<vmem>>, %arg5: memref<128x128xf32, #tpu.memory_space<vmem>>, %arg6: memref<1x128xf32, #tpu.memory_space<vmem>>, %arg7: memref<1x128xf32, #tpu.memory_space<vmem>>, %arg8: memref<128x128xf32, #tpu.memory_space<vmem>>, %arg9: memref<1x128xf32, #tpu.memory_space<vmem>>, %arg10: memref<128x128xf32, #tpu.memory_space<vmem>>, %arg11: memref<1x128xf32, #tpu.memory_space<vmem>>, %arg12: memref<1x128xf32, #tpu.memory_space<vmem>>, %arg13: memref<256x128xf32, #tpu.memory_space<vmem>>, %arg14: memref<1x128xf32, #tpu.memory_space<vmem>>, %arg15: memref<128x128xf32, #tpu.memory_space<vmem>>, %arg16: memref<1x128xf32, #tpu.memory_space<vmem>>, %arg17: memref<16x128xf32, #tpu.memory_space<vmem>>, %arg18: memref<16x3xf32, #tpu.memory_space<vmem>>) attributes {dimension_semantics = [#tpu.dimension_semantics<parallel>], iteration_bounds = array<i64: 4>, scalar_prefetch = 0 : i64, scratch_operands = 0 : i64, tpu.core_type = #tpu.core_type<tc>, window_params = [{transform_indices = @transform_0, window_bounds = array<i64: 16, 1>}, {transform_indices = @transform_1, window_bounds = array<i64: 16, 128>}, {transform_indices = @transform_2, window_bounds = array<i64: 16, 3>}, {pipeline_mode = #tpu.pipeline_mode<synchronous>, transform_indices = @transform_3, window_bounds = array<i64: 8, 1024>}, {pipeline_mode = #tpu.pipeline_mode<synchronous>, transform_indices = @transform_4, window_bounds = array<i64: 128, 128>}, {pipeline_mode = #tpu.pipeline_mode<synchronous>, transform_indices = @transform_5, window_bounds = array<i64: 1, 128>}, {pipeline_mode = #tpu.pipeline_mode<synchronous>, transform_indices = @transform_6, window_bounds = array<i64: 1, 128>}, {pipeline_mode = #tpu.pipeline_mode<synchronous>, transform_indices = @transform_7, window_bounds = array<i64: 128, 128>}, {pipeline_mode = #tpu.pipeline_mode<synchronous>, transform_indices = @transform_8, window_bounds = array<i64: 1, 128>}, {pipeline_mode = #tpu.pipeline_mode<synchronous>, transform_indices = @transform_9, window_bounds = array<i64: 128, 128>}, {pipeline_mode = #tpu.pipeline_mode<synchronous>, transform_indices = @transform_10, window_bounds = array<i64: 1, 128>}, {pipeline_mode = #tpu.pipeline_mode<synchronous>, transform_indices = @transform_11, window_bounds = array<i64: 1, 128>}, {pipeline_mode = #tpu.pipeline_mode<synchronous>, transform_indices = @transform_12, window_bounds = array<i64: 256, 128>}, {pipeline_mode = #tpu.pipeline_mode<synchronous>, transform_indices = @transform_13, window_bounds = array<i64: 1, 128>}, {pipeline_mode = #tpu.pipeline_mode<synchronous>, transform_indices = @transform_14, window_bounds = array<i64: 128, 128>}, {pipeline_mode = #tpu.pipeline_mode<synchronous>, transform_indices = @transform_15, window_bounds = array<i64: 1, 128>}, {transform_indices = @transform_16, window_bounds = array<i64: 16, 128>}, {transform_indices = @transform_17, window_bounds = array<i64: 16, 3>}]} {
    %c0 = arith.constant 0 : index
    %c0_0 = arith.constant 0 : index
    %0 = vector.load %arg1[%c0, %c0_0] : memref<16x1xi32, #tpu.memory_space<vmem>>, vector<16x1xi32>
    %c0_1 = arith.constant 0 : index
    %c0_2 = arith.constant 0 : index
    %1 = vector.load %arg2[%c0_1, %c0_2] : memref<16x128xf32, #tpu.memory_space<vmem>>, vector<16x128xf32>
    %c0_3 = arith.constant 0 : index
    %c0_4 = arith.constant 0 : index
    %2 = vector.load %arg3[%c0_3, %c0_4] : memref<16x3xf32, #tpu.memory_space<vmem>>, vector<16x3xf32>
    %3 = tpu.iota {dimensions = array<i32: 1>} : vector<16x8xi32>
    %4 = vector.broadcast %0 : vector<16x1xi32> to vector<16x8xi32>
    %5 = arith.cmpi eq, %4, %3 : vector<16x8xi32>
    %6 = arith.extui %5 : vector<16x8xi1> to vector<16x8xi32>
    %7 = arith.sitofp %6 : vector<16x8xi32> to vector<16x8xf32>
    %c0_5 = arith.constant 0 : index
    %c0_6 = arith.constant 0 : index
    %8 = vector.load %arg4[%c0_5, %c0_6] : memref<8x1024xf32, #tpu.memory_space<vmem>>, vector<8x1024xf32>
    %cst = arith.constant dense<0.000000e+00> : vector<16x1024xf32>
    %9 = tpu.matmul %7, %8, %cst {dimension_numbers = #tpu.dot_dimension_numbers<[1], [0], [0], [1], [0, 0, 1, 1], [], []>} : vector<16x8xf32>, vector<8x1024xf32>, vector<16x1024xf32> -> vector<16x1024xf32>
    %10 = vector.extract_strided_slice %9 {offsets = [0, 0], sizes = [16, 128], strides = [1, 1]} : vector<16x1024xf32> to vector<16x128xf32>
    %11 = vector.extract_strided_slice %9 {offsets = [0, 256], sizes = [16, 128], strides = [1, 1]} : vector<16x1024xf32> to vector<16x128xf32>
    %12 = vector.extract_strided_slice %9 {offsets = [0, 512], sizes = [16, 128], strides = [1, 1]} : vector<16x1024xf32> to vector<16x128xf32>
    %13 = vector.extract_strided_slice %9 {offsets = [0, 768], sizes = [16, 128], strides = [1, 1]} : vector<16x1024xf32> to vector<16x128xf32>
    %14 = vector.shape_cast %10 : vector<16x128xf32> to vector<1x16x128xf32>
    %15 = vector.shape_cast %11 : vector<16x128xf32> to vector<1x16x128xf32>
    %16 = vector.shape_cast %12 : vector<16x128xf32> to vector<1x16x128xf32>
    %17 = vector.shape_cast %13 : vector<16x128xf32> to vector<1x16x128xf32>
    %18 = tpu.concatenate %14, %15, %16, %17 in 0 : vector<1x16x128xf32>, vector<1x16x128xf32>, vector<1x16x128xf32>, vector<1x16x128xf32> -> vector<4x16x128xf32>
    %19 = vector.extract_strided_slice %9 {offsets = [0, 128], sizes = [16, 3], strides = [1, 1]} : vector<16x1024xf32> to vector<16x3xf32>
    %20 = vector.extract_strided_slice %9 {offsets = [0, 384], sizes = [16, 3], strides = [1, 1]} : vector<16x1024xf32> to vector<16x3xf32>
    %21 = vector.extract_strided_slice %9 {offsets = [0, 640], sizes = [16, 3], strides = [1, 1]} : vector<16x1024xf32> to vector<16x3xf32>
    %22 = vector.extract_strided_slice %9 {offsets = [0, 896], sizes = [16, 3], strides = [1, 1]} : vector<16x1024xf32> to vector<16x3xf32>
    %23 = vector.shape_cast %19 : vector<16x3xf32> to vector<1x16x3xf32>
    %24 = vector.shape_cast %20 : vector<16x3xf32> to vector<1x16x3xf32>
    %25 = vector.shape_cast %21 : vector<16x3xf32> to vector<1x16x3xf32>
    %26 = vector.shape_cast %22 : vector<16x3xf32> to vector<1x16x3xf32>
    %27 = tpu.concatenate %23, %24, %25, %26 in 0 : vector<1x16x3xf32>, vector<1x16x3xf32>, vector<1x16x3xf32>, vector<1x16x3xf32> -> vector<4x16x3xf32>
    %28 = vector.shape_cast %2 : vector<16x3xf32> to vector<1x16x3xf32>
    %29 = vector.broadcast %28 : vector<1x16x3xf32> to vector<4x16x3xf32>
    %30 = arith.subf %27, %29 : vector<4x16x3xf32>
    %31 = arith.mulf %30, %30 : vector<4x16x3xf32>
    %cst_7 = arith.constant dense<0.000000e+00> : vector<4x16xf32>
    %32 = vector.multi_reduction <add>, %31, %cst_7 [2] : vector<4x16x3xf32> to vector<4x16xf32>
    %33 = vector.shape_cast %32 : vector<4x16xf32> to vector<4x16x1xf32>
    %34 = math.sqrt %33 : vector<4x16x1xf32>
    %c0_8 = arith.constant 0 : index
    %c0_9 = arith.constant 0 : index
    %35 = vector.load %arg5[%c0_8, %c0_9] : memref<128x128xf32, #tpu.memory_space<vmem>>, vector<128x128xf32>
    %cst_10 = arith.constant dense<0.000000e+00> : vector<16x128xf32>
    %36 = tpu.matmul %1, %35, %cst_10 {dimension_numbers = #tpu.dot_dimension_numbers<[1], [0], [0], [1], [0, 0, 1, 1], [], []>} : vector<16x128xf32>, vector<128x128xf32>, vector<16x128xf32> -> vector<16x128xf32>
    %c0_11 = arith.constant 0 : index
    %c0_12 = arith.constant 0 : index
    %37 = vector.load %arg7[%c0_11, %c0_12] : memref<1x128xf32, #tpu.memory_space<vmem>>, vector<1x128xf32>
    %38 = vector.broadcast %37 : vector<1x128xf32> to vector<16x128xf32>
    %39 = arith.addf %36, %38 : vector<16x128xf32>
    %c0_13 = arith.constant 0 : index
    %c0_14 = arith.constant 0 : index
    %40 = vector.load %arg6[%c0_13, %c0_14] : memref<1x128xf32, #tpu.memory_space<vmem>>, vector<1x128xf32>
    %41 = vector.shape_cast %40 : vector<1x128xf32> to vector<1x1x128xf32>
    %42 = vector.broadcast %34 : vector<4x16x1xf32> to vector<4x16x128xf32>
    %43 = vector.broadcast %41 : vector<1x1x128xf32> to vector<4x16x128xf32>
    %44 = arith.mulf %42, %43 : vector<4x16x128xf32>
    %45 = arith.addf %18, %44 : vector<4x16x128xf32>
    %46 = vector.shape_cast %39 : vector<16x128xf32> to vector<1x16x128xf32>
    %47 = vector.broadcast %46 : vector<1x16x128xf32> to vector<4x16x128xf32>
    %48 = arith.addf %45, %47 : vector<4x16x128xf32>
    %49 = arith.negf %48 : vector<4x16x128xf32>
    %50 = math.exp %49 : vector<4x16x128xf32>
    %cst_15 = arith.constant 1.000000e+00 : f32
    %51 = vector.broadcast %cst_15 : f32 to vector<4x16x128xf32>
    %52 = arith.addf %51, %50 : vector<4x16x128xf32>
    %53 = arith.divf %51, %52 : vector<4x16x128xf32>
    %54 = arith.mulf %48, %53 : vector<4x16x128xf32>
    %55 = vector.shape_cast %54 : vector<4x16x128xf32> to vector<64x128xf32>
    %c0_16 = arith.constant 0 : index
    %c0_17 = arith.constant 0 : index
    %56 = vector.load %arg8[%c0_16, %c0_17] : memref<128x128xf32, #tpu.memory_space<vmem>>, vector<128x128xf32>
    %cst_18 = arith.constant dense<0.000000e+00> : vector<64x128xf32>
    %57 = tpu.matmul %55, %56, %cst_18 {dimension_numbers = #tpu.dot_dimension_numbers<[1], [0], [0], [1], [0, 0, 1, 1], [], []>} : vector<64x128xf32>, vector<128x128xf32>, vector<64x128xf32> -> vector<64x128xf32>
    %c0_19 = arith.constant 0 : index
    %c0_20 = arith.constant 0 : index
    %58 = vector.load %arg9[%c0_19, %c0_20] : memref<1x128xf32, #tpu.memory_space<vmem>>, vector<1x128xf32>
    %59 = vector.broadcast %58 : vector<1x128xf32> to vector<64x128xf32>
    %60 = arith.addf %57, %59 : vector<64x128xf32>
    %61 = arith.negf %60 : vector<64x128xf32>
    %62 = math.exp %61 : vector<64x128xf32>
    %cst_21 = arith.constant 1.000000e+00 : f32
    %63 = vector.broadcast %cst_21 : f32 to vector<64x128xf32>
    %64 = arith.addf %63, %62 : vector<64x128xf32>
    %65 = arith.divf %63, %64 : vector<64x128xf32>
    %66 = arith.mulf %60, %65 : vector<64x128xf32>
    %c0_22 = arith.constant 0 : index
    %c0_23 = arith.constant 0 : index
    %67 = vector.load %arg10[%c0_22, %c0_23] : memref<128x128xf32, #tpu.memory_space<vmem>>, vector<128x128xf32>
    %cst_24 = arith.constant dense<0.000000e+00> : vector<64x128xf32>
    %68 = tpu.matmul %66, %67, %cst_24 {dimension_numbers = #tpu.dot_dimension_numbers<[1], [0], [0], [1], [0, 0, 1, 1], [], []>} : vector<64x128xf32>, vector<128x128xf32>, vector<64x128xf32> -> vector<64x128xf32>
    %c0_25 = arith.constant 0 : index
    %c0_26 = arith.constant 0 : index
    %69 = vector.load %arg11[%c0_25, %c0_26] : memref<1x128xf32, #tpu.memory_space<vmem>>, vector<1x128xf32>
    %70 = vector.broadcast %69 : vector<1x128xf32> to vector<64x128xf32>
    %71 = arith.addf %68, %70 : vector<64x128xf32>
    %72 = arith.negf %71 : vector<64x128xf32>
    %73 = math.exp %72 : vector<64x128xf32>
    %cst_27 = arith.constant 1.000000e+00 : f32
    %74 = vector.broadcast %cst_27 : f32 to vector<64x128xf32>
    %75 = arith.addf %74, %73 : vector<64x128xf32>
    %76 = arith.divf %74, %75 : vector<64x128xf32>
    %77 = arith.mulf %71, %76 : vector<64x128xf32>
    %c0_28 = arith.constant 0 : index
    %c0_29 = arith.constant 0 : index
    %78 = vector.load %arg12[%c0_28, %c0_29] : memref<1x128xf32, #tpu.memory_space<vmem>>, vector<1x128xf32>
    %79 = vector.broadcast %78 : vector<1x128xf32> to vector<64x128xf32>
    %80 = arith.mulf %77, %79 : vector<64x128xf32>
    %cst_30 = arith.constant dense<0.000000e+00> : vector<64xf32>
    %81 = vector.multi_reduction <add>, %80, %cst_30 [1] : vector<64x128xf32> to vector<64xf32>
    %82 = vector.shape_cast %81 : vector<64xf32> to vector<64x1xf32>
    %83 = vector.shape_cast %82 : vector<64x1xf32> to vector<4x16x1xf32>
    %cst_31 = arith.constant 0.000000e+00 : f32
    %84 = vector.broadcast %cst_31 : f32 to vector<4x16x3xf32>
    %85 = arith.subf %84, %30 : vector<4x16x3xf32>
    %86 = vector.broadcast %83 : vector<4x16x1xf32> to vector<4x16x3xf32>
    %87 = arith.mulf %85, %86 : vector<4x16x3xf32>
    %cst_32 = arith.constant dense<0.000000e+00> : vector<16x3xf32>
    %88 = vector.multi_reduction <add>, %87, %cst_32 [0] : vector<4x16x3xf32> to vector<16x3xf32>
    %cst_33 = arith.constant 2.500000e-01 : f32
    %89 = vector.broadcast %cst_33 : f32 to vector<16x3xf32>
    %90 = arith.mulf %88, %89 : vector<16x3xf32>
    %91 = arith.addf %2, %90 : vector<16x3xf32>
    %c0_34 = arith.constant 0 : index
    %c0_35 = arith.constant 0 : index
    %92 = vector.load %arg18[%c0_34, %c0_35] : memref<16x3xf32, #tpu.memory_space<vmem>>, vector<16x3xf32>
    tpu.vector_store %arg18[%c0_34, %c0_35], %91 {strides = array<i32>} : memref<16x3xf32, #tpu.memory_space<vmem>>, vector<16x3xf32>,
    %93 = vector.shape_cast %66 : vector<64x128xf32> to vector<4x16x128xf32>
    %cst_36 = arith.constant dense<0.000000e+00> : vector<16x128xf32>
    %94 = vector.multi_reduction <add>, %93, %cst_36 [0] : vector<4x16x128xf32> to vector<16x128xf32>
    %cst_37 = arith.constant 2.500000e-01 : f32
    %95 = vector.broadcast %cst_37 : f32 to vector<16x128xf32>
    %96 = arith.mulf %94, %95 : vector<16x128xf32>
    %97 = tpu.concatenate %1, %96 in 1 : vector<16x128xf32>, vector<16x128xf32> -> vector<16x256xf32>
    %c0_38 = arith.constant 0 : index
    %c0_39 = arith.constant 0 : index
    %98 = vector.load %arg13[%c0_38, %c0_39] : memref<256x128xf32, #tpu.memory_space<vmem>>, vector<256x128xf32>
    %cst_40 = arith.constant dense<0.000000e+00> : vector<16x128xf32>
    %99 = tpu.matmul %97, %98, %cst_40 {dimension_numbers = #tpu.dot_dimension_numbers<[1], [0], [0], [1], [0, 0, 1, 1], [], []>} : vector<16x256xf32>, vector<256x128xf32>, vector<16x128xf32> -> vector<16x128xf32>
    %c0_41 = arith.constant 0 : index
    %c0_42 = arith.constant 0 : index
    %100 = vector.load %arg14[%c0_41, %c0_42] : memref<1x128xf32, #tpu.memory_space<vmem>>, vector<1x128xf32>
    %101 = vector.broadcast %100 : vector<1x128xf32> to vector<16x128xf32>
    %102 = arith.addf %99, %101 : vector<16x128xf32>
    %103 = arith.negf %102 : vector<16x128xf32>
    %104 = math.exp %103 : vector<16x128xf32>
    %cst_43 = arith.constant 1.000000e+00 : f32
    %105 = vector.broadcast %cst_43 : f32 to vector<16x128xf32>
    %106 = arith.addf %105, %104 : vector<16x128xf32>
    %107 = arith.divf %105, %106 : vector<16x128xf32>
    %108 = arith.mulf %102, %107 : vector<16x128xf32>
    %c0_44 = arith.constant 0 : index
    %c0_45 = arith.constant 0 : index
    %109 = vector.load %arg15[%c0_44, %c0_45] : memref<128x128xf32, #tpu.memory_space<vmem>>, vector<128x128xf32>
    %cst_46 = arith.constant dense<0.000000e+00> : vector<16x128xf32>
    %110 = tpu.matmul %108, %109, %cst_46 {dimension_numbers = #tpu.dot_dimension_numbers<[1], [0], [0], [1], [0, 0, 1, 1], [], []>} : vector<16x128xf32>, vector<128x128xf32>, vector<16x128xf32> -> vector<16x128xf32>
    %111 = arith.addf %1, %110 : vector<16x128xf32>
    %c0_47 = arith.constant 0 : index
    %c0_48 = arith.constant 0 : index
    %112 = vector.load %arg16[%c0_47, %c0_48] : memref<1x128xf32, #tpu.memory_space<vmem>>, vector<1x128xf32>
    %113 = vector.broadcast %112 : vector<1x128xf32> to vector<16x128xf32>
    %114 = arith.addf %111, %113 : vector<16x128xf32>
    %c0_49 = arith.constant 0 : index
    %c0_50 = arith.constant 0 : index
    %115 = vector.load %arg17[%c0_49, %c0_50] : memref<16x128xf32, #tpu.memory_space<vmem>>, vector<16x128xf32>
    tpu.vector_store %arg17[%c0_49, %c0_50], %114 {strides = array<i32>} : memref<16x128xf32, #tpu.memory_space<vmem>>, vector<16x128xf32>,
    return
  }
  func.func @transform_0(%arg0: i32) -> (i32, i32) {
    %c0_i32 = arith.constant 0 : i32
    %c0_i32_0 = arith.constant 0 : i32
    return %arg0, %c0_i32 : i32, i32
  }
  func.func @transform_1(%arg0: i32) -> (i32, i32) {
    %c0_i32 = arith.constant 0 : i32
    %c0_i32_0 = arith.constant 0 : i32
    return %arg0, %c0_i32 : i32, i32
  }
  func.func @transform_2(%arg0: i32) -> (i32, i32) {
    %c0_i32 = arith.constant 0 : i32
    %c0_i32_0 = arith.constant 0 : i32
    return %arg0, %c0_i32 : i32, i32
  }
  func.func @transform_3(%arg0: i32) -> (i32, i32) {
    %c0_i32 = arith.constant 0 : i32
    %c0_i32_0 = arith.constant 0 : i32
    %c0_i32_1 = arith.constant 0 : i32
    return %c0_i32, %c0_i32_0 : i32, i32
  }
  func.func @transform_4(%arg0: i32) -> (i32, i32) {
    %c0_i32 = arith.constant 0 : i32
    %c0_i32_0 = arith.constant 0 : i32
    %c0_i32_1 = arith.constant 0 : i32
    return %c0_i32, %c0_i32_0 : i32, i32
  }
  func.func @transform_5(%arg0: i32) -> (i32, i32) {
    %c0_i32 = arith.constant 0 : i32
    %c0_i32_0 = arith.constant 0 : i32
    %c0_i32_1 = arith.constant 0 : i32
    return %c0_i32, %c0_i32_0 : i32, i32
  }
  func.func @transform_6(%arg0: i32) -> (i32, i32) {
    %c0_i32 = arith.constant 0 : i32
    %c0_i32_0 = arith.constant 0 : i32
    %c0_i32_1 = arith.constant 0 : i32
    return %c0_i32, %c0_i32_0 : i32, i32
  }
  func.func @transform_7(%arg0: i32) -> (i32, i32) {
    %c0_i32 = arith.constant 0 : i32
    %c0_i32_0 = arith.constant 0 : i32
    %c0_i32_1 = arith.constant 0 : i32
    return %c0_i32, %c0_i32_0 : i32, i32
  }
  func.func @transform_8(%arg0: i32) -> (i32, i32) {
    %c0_i32 = arith.constant 0 : i32
    %c0_i32_0 = arith.constant 0 : i32
    %c0_i32_1 = arith.constant 0 : i32
    return %c0_i32, %c0_i32_0 : i32, i32
  }
  func.func @transform_9(%arg0: i32) -> (i32, i32) {
    %c0_i32 = arith.constant 0 : i32
    %c0_i32_0 = arith.constant 0 : i32
    %c0_i32_1 = arith.constant 0 : i32
    return %c0_i32, %c0_i32_0 : i32, i32
  }
  func.func @transform_10(%arg0: i32) -> (i32, i32) {
    %c0_i32 = arith.constant 0 : i32
    %c0_i32_0 = arith.constant 0 : i32
    %c0_i32_1 = arith.constant 0 : i32
    return %c0_i32, %c0_i32_0 : i32, i32
  }
  func.func @transform_11(%arg0: i32) -> (i32, i32) {
    %c0_i32 = arith.constant 0 : i32
    %c0_i32_0 = arith.constant 0 : i32
    %c0_i32_1 = arith.constant 0 : i32
    return %c0_i32, %c0_i32_0 : i32, i32
  }
  func.func @transform_12(%arg0: i32) -> (i32, i32) {
    %c0_i32 = arith.constant 0 : i32
    %c0_i32_0 = arith.constant 0 : i32
    %c0_i32_1 = arith.constant 0 : i32
    return %c0_i32, %c0_i32_0 : i32, i32
  }
  func.func @transform_13(%arg0: i32) -> (i32, i32) {
    %c0_i32 = arith.constant 0 : i32
    %c0_i32_0 = arith.constant 0 : i32
    %c0_i32_1 = arith.constant 0 : i32
    return %c0_i32, %c0_i32_0 : i32, i32
  }
  func.func @transform_14(%arg0: i32) -> (i32, i32) {
    %c0_i32 = arith.constant 0 : i32
    %c0_i32_0 = arith.constant 0 : i32
    %c0_i32_1 = arith.constant 0 : i32
    return %c0_i32, %c0_i32_0 : i32, i32
  }
  func.func @transform_15(%arg0: i32) -> (i32, i32) {
    %c0_i32 = arith.constant 0 : i32
    %c0_i32_0 = arith.constant 0 : i32
    %c0_i32_1 = arith.constant 0 : i32
    return %c0_i32, %c0_i32_0 : i32, i32
  }
  func.func @transform_16(%arg0: i32) -> (i32, i32) {
    %c0_i32 = arith.constant 0 : i32
    %c0_i32_0 = arith.constant 0 : i32
    return %arg0, %c0_i32 : i32, i32
  }
  func.func @transform_17(%arg0: i32) -> (i32, i32) {
    %c0_i32 = arith.constant 0 : i32
    %c0_i32_0 = arith.constant 0 : i32
    return %arg0, %c0_i32 : i32, i32
  }
}

</mosaic_0001>

<llo_original>
// kernel: egcl_v2a_forward.1
$region0: #{egcl_v2a_forward.1}
  #allocation0 [shape = 'u32[]', space=smem, size = 0x4, offset = 0x4, fixed_abs, tag = 'smem constant byte address 0x4 - core index']
  #allocation1 [shape = 'u32[144,128]{1,0:T(1,128)}', space=vmem, size = 0x12000, scoped, tag = 'internal scratch']
  %s0 = inlined_call_operand.vmem [shape: s32[64,1], index: 0, kind: input, shape index: {}]
  %s1 = inlined_call_operand.vmem [shape: f32[64,128], index: 1, kind: input, shape index: {}]
  %s2 = inlined_call_operand.vmem [shape: f32[64,3], index: 2, kind: input, shape index: {}]
  %s3 = inlined_call_operand.vmem [shape: f32[8,1024], index: 3, kind: input, shape index: {}]
  %s4 = inlined_call_operand.vmem [shape: f32[128,128], index: 4, kind: input, shape index: {}]
  %s5 = inlined_call_operand.vmem [shape: f32[1,128], index: 5, kind: input, shape index: {}]
  %s6 = inlined_call_operand.vmem [shape: f32[1,128], index: 6, kind: input, shape index: {}]
  %s7 = inlined_call_operand.vmem [shape: f32[128,128], index: 7, kind: input, shape index: {}]
  %s8 = inlined_call_operand.vmem [shape: f32[1,128], index: 8, kind: input, shape index: {}]
  %s9 = inlined_call_operand.vmem [shape: f32[128,128], index: 9, kind: input, shape index: {}]
  %s10 = inlined_call_operand.vmem [shape: f32[1,128], index: 10, kind: input, shape index: {}]
  %s11 = inlined_call_operand.vmem [shape: f32[1,128], index: 11, kind: input, shape index: {}]
  %s12 = inlined_call_operand.vmem [shape: f32[256,128], index: 12, kind: input, shape index: {}]
  %s13 = inlined_call_operand.vmem [shape: f32[1,128], index: 13, kind: input, shape index: {}]
  %s14 = inlined_call_operand.vmem [shape: f32[128,128], index: 14, kind: input, shape index: {}]
  %s15 = inlined_call_operand.vmem [shape: f32[1,128], index: 15, kind: input, shape index: {}]
  %s16 = inlined_call_operand.vmem [shape: f32[64,128], index: 16, kind: output, shape index: {0}]
  %s17 = inlined_call_operand.vmem [shape: f32[64,3], index: 17, kind: output, shape index: {1}]
  %18 = xla_tuple %s16, %s17
  %s19 = sld [smem:[#allocation0]]
  $region105: #{egcl_v2a_forward.1} parent=0
    _
  %s21 = ssub.s32 1, %s19
  %s22 = scalar_select 0, %s21, %s19
  loop: start=0, step=1, limit=6
  $region2: #{egcl_v2a_forward.1} parent=0 // loop_pre_header
    _
  $region3: #{egcl_v2a_forward.1} parent=0 // loop_header
    %s24 = sphi 0, %s28
    %p25 = scmp.ge.s32.totalorder %s24, 6
    %s34 = sphi 0, %s36
    %s37 = sphi 0, %s34
    %s38 = sphi 0, %s37
    %s54 = sphi 0, %s38
    %s60 = sphi 0, %s62
    %s63 = sphi 0, %s60
    %s64 = sphi 0, %s63
    %s80 = sphi 0, %s64
    %s86 = sphi 0, %s88
    %s89 = sphi 0, %s86
    %s90 = sphi 0, %s89
    %s106 = sphi 0, %s90
    %s110 = sphi 0, %s110
    %s112 = sphi 0, %s110
    %s113 = sphi 0, %s112
    %s127 = sphi 0, %s113
    %s131 = sphi 0, %s131
    %s133 = sphi 0, %s131
    %s134 = sphi 0, %s133
    %s148 = sphi 0, %s134
    %s152 = sphi 0, %s152
    %s154 = sphi 0, %s152
    %s155 = sphi 0, %s154
    %s169 = sphi 0, %s155
    %s173 = sphi 0, %s173
    %s175 = sphi 0, %s173
    %s176 = sphi 0, %s175
    %s190 = sphi 0, %s176
    %s194 = sphi 0, %s194
    %s196 = sphi 0, %s194
    %s197 = sphi 0, %s196
    %s211 = sphi 0, %s197
    %s215 = sphi 0, %s215
    %s217 = sphi 0, %s215
    %s218 = sphi 0, %s217
    %s232 = sphi 0, %s218
    %s236 = sphi 0, %s236
    %s238 = sphi 0, %s236
    %s239 = sphi 0, %s238
    %s253 = sphi 0, %s239
    %s257 = sphi 0, %s257
    %s259 = sphi 0, %s257
    %s260 = sphi 0, %s259
    %s274 = sphi 0, %s260
    %s278 = sphi 0, %s278
    %s280 = sphi 0, %s278
    %s281 = sphi 0, %s280
    %s295 = sphi 0, %s281
    %s299 = sphi 0, %s299
    %s301 = sphi 0, %s299
    %s302 = sphi 0, %s301
    %s316 = sphi 0, %s302
    %s320 = sphi 0, %s320
    %s322 = sphi 0, %s320
    %s323 = sphi 0, %s322
    %s337 = sphi 0, %s323
    %s341 = sphi 0, %s341
    %s343 = sphi 0, %s341
    %s344 = sphi 0, %s343
    %s358 = sphi 0, %s344
    %s362 = sphi 0, %s362
    %s364 = sphi 0, %s362
    %s365 = sphi 0, %s364
    %s379 = sphi 0, %s365
    %s385 = sphi 0, %s387
    %s388 = sphi 0, %s385
    %s389 = sphi 0, %s388
    %s405 = sphi 0, %s389
    %s411 = sphi 0, %s413
    %s414 = sphi 0, %s411
    %s415 = sphi 0, %s414
    %s431 = sphi 0, %s415
  $region4: #{egcl_v2a_forward.1} parent=0 // loop_header_branch
    %27 = sbr.rel (%p25) target = $region8
  $region5: #{egcl_v2a_forward.1} parent=0 // loop_body
    %s29 = ssub.s32 %s24, 1
    %s30 = ssub.s32 %s24, 2
    %s31 = sadd.s32 %s24, 1
    %s32 = ssub.s32 %s24, %s31
    %p33 = scmp.eq.s32.totalorder %s32, 0
    %s35 = sadd.s32 %s34, 1
    %s36 = scalar_select %p33, %s34, %s35
    %p39 = pneg %p33
    %p40 = scmp.eq.s32.totalorder %s24, 3
    %p41 = por %p39, %p40
    %p42 = scmp.ne.s32.totalorder %s34, %s37
    %p43 = scmp.eq.s32.totalorder %s24, 0
    %p44 = por %p42, %p43
    %p45 = scmp.ne.s32.totalorder %s34, %s37
    %p46 = scmp.eq.s32.totalorder %s29, 3
    %p47 = por %p45, %p46
    %p48 = scmp.ne.s32.totalorder %s37, %s38
    %p49 = scmp.eq.s32.totalorder %s29, 0
    %p50 = por %p48, %p49
    %p51 = scmp.ne.s32.totalorder %s37, %s38
    %p52 = scmp.eq.s32.totalorder %s30, 3
    %p53 = por %p51, %p52
    %p55 = scmp.ne.s32.totalorder %s38, %s54
    %p56 = scmp.eq.s32.totalorder %s30, 0
    %p57 = por %p55, %p56
    %s58 = ssub.s32 %s24, %s31
    %p59 = scmp.eq.s32.totalorder %s58, 0
    %s61 = sadd.s32 %s60, 1
    %s62 = scalar_select %p59, %s60, %s61
    %p65 = pneg %p59
    %p66 = scmp.eq.s32.totalorder %s24, 3
    %p67 = por %p65, %p66
    %p68 = scmp.ne.s32.totalorder %s60, %s63
    %p69 = scmp.eq.s32.totalorder %s24, 0
    %p70 = por %p68, %p69
    %p71 = scmp.ne.s32.totalorder %s60, %s63
    %p72 = scmp.eq.s32.totalorder %s29, 3
    %p73 = por %p71, %p72
    %p74 = scmp.ne.s32.totalorder %s63, %s64
    %p75 = scmp.eq.s32.totalorder %s29, 0
    %p76 = por %p74, %p75
    %p77 = scmp.ne.s32.totalorder %s63, %s64
    %p78 = scmp.eq.s32.totalorder %s30, 3
    %p79 = por %p77, %p78
    %p81 = scmp.ne.s32.totalorder %s64, %s80
    %p82 = scmp.eq.s32.totalorder %s30, 0
    %p83 = por %p81, %p82
    %s84 = ssub.s32 %s24, %s31
    %p85 = scmp.eq.s32.totalorder %s84, 0
    %s87 = sadd.s32 %s86, 1
    %s88 = scalar_select %p85, %s86, %s87
    %p91 = pneg %p85
    %p92 = scmp.eq.s32.totalorder %s24, 3
    %p93 = por %p91, %p92
    %p94 = scmp.ne.s32.totalorder %s86, %s89
    %p95 = scmp.eq.s32.totalorder %s24, 0
    %p96 = por %p94, %p95
    %p97 = scmp.ne.s32.totalorder %s86, %s89
    %p98 = scmp.eq.s32.totalorder %s29, 3
    %p99 = por %p97, %p98
    %p100 = scmp.ne.s32.totalorder %s89, %s90
    %p101 = scmp.eq.s32.totalorder %s29, 0
    %p102 = por %p100, %p101
    %p103 = scmp.ne.s32.totalorder %s89, %s90
    %p104 = scmp.eq.s32.totalorder %s30, 3
    %p105 = por %p103, %p104
    %p107 = scmp.ne.s32.totalorder %s90, %s106
    %p108 = scmp.eq.s32.totalorder %s30, 0
    %p109 = por %p107, %p108
    %s111 = sadd.s32 %s110, 1
    %p114 = scmp.eq.s32.totalorder %s24, 3
    %p115 = scmp.ne.s32.totalorder %s110, %s112
    %p116 = scmp.eq.s32.totalorder %s24, 0
    %p117 = por %p115, %p116
    %p118 = scmp.ne.s32.totalorder %s110, %s112
    %p119 = scmp.eq.s32.totalorder %s29, 3
    %p120 = por %p118, %p119
    %p121 = scmp.ne.s32.totalorder %s112, %s113
    %p122 = scmp.eq.s32.totalorder %s29, 0
    %p123 = por %p121, %p122
    %p124 = scmp.ne.s32.totalorder %s112, %s113
    %p125 = scmp.eq.s32.totalorder %s30, 3
    %p126 = por %p124, %p125
    %p128 = scmp.ne.s32.totalorder %s113, %s127
    %p129 = scmp.eq.s32.totalorder %s30, 0
    %p130 = por %p128, %p129
    %s132 = sadd.s32 %s131, 1
    %p135 = scmp.eq.s32.totalorder %s24, 3
    %p136 = scmp.ne.s32.totalorder %s131, %s133
    %p137 = scmp.eq.s32.totalorder %s24, 0
    %p138 = por %p136, %p137
    %p139 = scmp.ne.s32.totalorder %s131, %s133
    %p140 = scmp.eq.s32.totalorder %s29, 3
    %p141 = por %p139, %p140
    %p142 = scmp.ne.s32.totalorder %s133, %s134
    %p143 = scmp.eq.s32.totalorder %s29, 0
    %p144 = por %p142, %p143
    %p145 = scmp.ne.s32.totalorder %s133, %s134
    %p146 = scmp.eq.s32.totalorder %s30, 3
    %p147 = por %p145, %p146
    %p149 = scmp.ne.s32.totalorder %s134, %s148
    %p150 = scmp.eq.s32.totalorder %s30, 0
    %p151 = por %p149, %p150
    %s153 = sadd.s32 %s152, 1
    %p156 = scmp.eq.s32.totalorder %s24, 3
    %p157 = scmp.ne.s32.totalorder %s152, %s154
    %p158 = scmp.eq.s32.totalorder %s24, 0
    %p159 = por %p157, %p158
    %p160 = scmp.ne.s32.totalorder %s152, %s154
    %p161 = scmp.eq.s32.totalorder %s29, 3
    %p162 = por %p160, %p161
    %p163 = scmp.ne.s32.totalorder %s154, %s155
    %p164 = scmp.eq.s32.totalorder %s29, 0
    %p165 = por %p163, %p164
    %p166 = scmp.ne.s32.totalorder %s154, %s155
    %p167 = scmp.eq.s32.totalorder %s30, 3
    %p168 = por %p166, %p167
    %p170 = scmp.ne.s32.totalorder %s155, %s169
    %p171 = scmp.eq.s32.totalorder %s30, 0
    %p172 = por %p170, %p171
    %s174 = sadd.s32 %s173, 1
    %p177 = scmp.eq.s32.totalorder %s24, 3
    %p178 = scmp.ne.s32.totalorder %s173, %s175
    %p179 = scmp.eq.s32.totalorder %s24, 0
    %p180 = por %p178, %p179
    %p181 = scmp.ne.s32.totalorder %s173, %s175
    %p182 = scmp.eq.s32.totalorder %s29, 3
    %p183 = por %p181, %p182
    %p184 = scmp.ne.s32.totalorder %s175, %s176
    %p185 = scmp.eq.s32.totalorder %s29, 0
    %p186 = por %p184, %p185
    %p187 = scmp.ne.s32.totalorder %s175, %s176
    %p188 = scmp.eq.s32.totalorder %s30, 3
    %p189 = por %p187, %p188
    %p191 = scmp.ne.s32.totalorder %s176, %s190
    %p192 = scmp.eq.s32.totalorder %s30, 0
    %p193 = por %p191, %p192
    %s195 = sadd.s32 %s194, 1
    %p198 = scmp.eq.s32.totalorder %s24, 3
    %p199 = scmp.ne.s32.totalorder %s194, %s196
    %p200 = scmp.eq.s32.totalorder %s24, 0
    %p201 = por %p199, %p200
    %p202 = scmp.ne.s32.totalorder %s194, %s196
    %p203 = scmp.eq.s32.totalorder %s29, 3
    %p204 = por %p202, %p203
    %p205 = scmp.ne.s32.totalorder %s196, %s197
    %p206 = scmp.eq.s32.totalorder %s29, 0
    %p207 = por %p205, %p206
    %p208 = scmp.ne.s32.totalorder %s196, %s197
    %p209 = scmp.eq.s32.totalorder %s30, 3
    %p210 = por %p208, %p209
    %p212 = scmp.ne.s32.totalorder %s197, %s211
    %p213 = scmp.eq.s32.totalorder %s30, 0
    %p214 = por %p212, %p213
    %s216 = sadd.s32 %s215, 1
    %p219 = scmp.eq.s32.totalorder %s24, 3
    %p220 = scmp.ne.s32.totalorder %s215, %s217
    %p221 = scmp.eq.s32.totalorder %s24, 0
    %p222 = por %p220, %p221
    %p223 = scmp.ne.s32.totalorder %s215, %s217
    %p224 = scmp.eq.s32.totalorder %s29, 3
    %p225 = por %p223, %p224
    %p226 = scmp.ne.s32.totalorder %s217, %s218
    %p227 = scmp.eq.s32.totalorder %s29, 0
    %p228 = por %p226, %p227
    %p229 = scmp.ne.s32.totalorder %s217, %s218
    %p230 = scmp.eq.s32.totalorder %s30, 3
    %p231 = por %p229, %p230
    %p233 = scmp.ne.s32.totalorder %s218, %s232
    %p234 = scmp.eq.s32.totalorder %s30, 0
    %p235 = por %p233, %p234
    %s237 = sadd.s32 %s236, 1
    %p240 = scmp.eq.s32.totalorder %s24, 3
    %p241 = scmp.ne.s32.totalorder %s236, %s238
    %p242 = scmp.eq.s32.totalorder %s24, 0
    %p243 = por %p241, %p242
    %p244 = scmp.ne.s32.totalorder %s236, %s238
    %p245 = scmp.eq.s32.totalorder %s29, 3
    %p246 = por %p244, %p245
    %p247 = scmp.ne.s32.totalorder %s238, %s239
    %p248 = scmp.eq.s32.totalorder %s29, 0
    %p249 = por %p247, %p248
    %p250 = scmp.ne.s32.totalorder %s238, %s239
    %p251 = scmp.eq.s32.totalorder %s30, 3
    %p252 = por %p250, %p251
    %p254 = scmp.ne.s32.totalorder %s239, %s253
    %p255 = scmp.eq.s32.totalorder %s30, 0
    %p256 = por %p254, %p255
    %s258 = sadd.s32 %s257, 1
    %p261 = scmp.eq.s32.totalorder %s24, 3
    %p262 = scmp.ne.s32.totalorder %s257, %s259
    %p263 = scmp.eq.s32.totalorder %s24, 0
    %p264 = por %p262, %p263
    %p265 = scmp.ne.s32.totalorder %s257, %s259
    %p266 = scmp.eq.s32.totalorder %s29, 3
    %p267 = por %p265, %p266
    %p268 = scmp.ne.s32.totalorder %s259, %s260
    %p269 = scmp.eq.s32.totalorder %s29, 0
    %p270 = por %p268, %p269
    %p271 = scmp.ne.s32.totalorder %s259, %s260
    %p272 = scmp.eq.s32.totalorder %s30, 3
    %p273 = por %p271, %p272
    %p275 = scmp.ne.s32.totalorder %s260, %s274
    %p276 = scmp.eq.s32.totalorder %s30, 0
    %p277 = por %p275, %p276
    %s279 = sadd.s32 %s278, 1
    %p282 = scmp.eq.s32.totalorder %s24, 3
    %p283 = scmp.ne.s32.totalorder %s278, %s280
    %p284 = scmp.eq.s32.totalorder %s24, 0
    %p285 = por %p283, %p284
    %p286 = scmp.ne.s32.totalorder %s278, %s280
    %p287 = scmp.eq.s32.totalorder %s29, 3
    %p288 = por %p286, %p287
    %p289 = scmp.ne.s32.totalorder %s280, %s281
    %p290 = scmp.eq.s32.totalorder %s29, 0
    %p291 = por %p289, %p290
    %p292 = scmp.ne.s32.totalorder %s280, %s281
    %p293 = scmp.eq.s32.totalorder %s30, 3
    %p294 = por %p292, %p293
    %p296 = scmp.ne.s32.totalorder %s281, %s295
    %p297 = scmp.eq.s32.totalorder %s30, 0
    %p298 = por %p296, %p297
    %s300 = sadd.s32 %s299, 1
    %p303 = scmp.eq.s32.totalorder %s24, 3
    %p304 = scmp.ne.s32.totalorder %s299, %s301
    %p305 = scmp.eq.s32.totalorder %s24, 0
    %p306 = por %p304, %p305
    %p307 = scmp.ne.s32.totalorder %s299, %s301
    %p308 = scmp.eq.s32.totalorder %s29, 3
    %p309 = por %p307, %p308
    %p310 = scmp.ne.s32.totalorder %s301, %s302
    %p311 = scmp.eq.s32.totalorder %s29, 0
    %p312 = por %p310, %p311
    %p313 = scmp.ne.s32.totalorder %s301, %s302
    %p314 = scmp.eq.s32.totalorder %s30, 3
    %p315 = por %p313, %p314
    %p317 = scmp.ne.s32.totalorder %s302, %s316
    %p318 = scmp.eq.s32.totalorder %s30, 0
    %p319 = por %p317, %p318
    %s321 = sadd.s32 %s320, 1
    %p324 = scmp.eq.s32.totalorder %s24, 3
    %p325 = scmp.ne.s32.totalorder %s320, %s322
    %p326 = scmp.eq.s32.totalorder %s24, 0
    %p327 = por %p325, %p326
    %p328 = scmp.ne.s32.totalorder %s320, %s322
    %p329 = scmp.eq.s32.totalorder %s29, 3
    %p330 = por %p328, %p329
    %p331 = scmp.ne.s32.totalorder %s322, %s323
    %p332 = scmp.eq.s32.totalorder %s29, 0
    %p333 = por %p331, %p332
    %p334 = scmp.ne.s32.totalorder %s322, %s323
    %p335 = scmp.eq.s32.totalorder %s30, 3
    %p336 = por %p334, %p335
    %p338 = scmp.ne.s32.totalorder %s323, %s337
    %p339 = scmp.eq.s32.totalorder %s30, 0
    %p340 = por %p338, %p339
    %s342 = sadd.s32 %s341, 1
    %p345 = scmp.eq.s32.totalorder %s24, 3
    %p346 = scmp.ne.s32.totalorder %s341, %s343
    %p347 = scmp.eq.s32.totalorder %s24, 0
    %p348 = por %p346, %p347
    %p349 = scmp.ne.s32.totalorder %s341, %s343
    %p350 = scmp.eq.s32.totalorder %s29, 3
    %p351 = por %p349, %p350
    %p352 = scmp.ne.s32.totalorder %s343, %s344
    %p353 = scmp.eq.s32.totalorder %s29, 0
    %p354 = por %p352, %p353
    %p355 = scmp.ne.s32.totalorder %s343, %s344
    %p356 = scmp.eq.s32.totalorder %s30, 3
    %p357 = por %p355, %p356
    %p359 = scmp.ne.s32.totalorder %s344, %s358
    %p360 = scmp.eq.s32.totalorder %s30, 0
    %p361 = por %p359, %p360
    %s363 = sadd.s32 %s362, 1
    %p366 = scmp.eq.s32.totalorder %s24, 3
    %p367 = scmp.ne.s32.totalorder %s362, %s364
    %p368 = scmp.eq.s32.totalorder %s24, 0
    %p369 = por %p367, %p368
    %p370 = scmp.ne.s32.totalorder %s362, %s364
    %p371 = scmp.eq.s32.totalorder %s29, 3
    %p372 = por %p370, %p371
    %p373 = scmp.ne.s32.totalorder %s364, %s365
    %p374 = scmp.eq.s32.totalorder %s29, 0
    %p375 = por %p373, %p374
    %p376 = scmp.ne.s32.totalorder %s364, %s365
    %p377 = scmp.eq.s32.totalorder %s30, 3
    %p378 = por %p376, %p377
    %p380 = scmp.ne.s32.totalorder %s365, %s379
    %p381 = scmp.eq.s32.totalorder %s30, 0
    %p382 = por %p380, %p381
    %s383 = ssub.s32 %s24, %s31
    %p384 = scmp.eq.s32.totalorder %s383, 0
    %s386 = sadd.s32 %s385, 1
    %s387 = scalar_select %p384, %s385, %s386
    %p390 = pneg %p384
    %p391 = scmp.eq.s32.totalorder %s24, 3
    %p392 = por %p390, %p391
    %p393 = scmp.ne.s32.totalorder %s385, %s388
    %p394 = scmp.eq.s32.totalorder %s24, 0
    %p395 = por %p393, %p394
    %p396 = scmp.ne.s32.totalorder %s385, %s388
    %p397 = scmp.eq.s32.totalorder %s29, 3
    %p398 = por %p396, %p397
    %p399 = scmp.ne.s32.totalorder %s388, %s389
    %p400 = scmp.eq.s32.totalorder %s29, 0
    %p401 = por %p399, %p400
    %p402 = scmp.ne.s32.totalorder %s388, %s389
    %p403 = scmp.eq.s32.totalorder %s30, 3
    %p404 = por %p402, %p403
    %p406 = scmp.ne.s32.totalorder %s389, %s405
    %p407 = scmp.eq.s32.totalorder %s30, 0
    %p408 = por %p406, %p407
    %s409 = ssub.s32 %s24, %s31
    %p410 = scmp.eq.s32.totalorder %s409, 0
    %s412 = sadd.s32 %s411, 1
    %s413 = scalar_select %p410, %s411, %s412
    %p416 = pneg %p410
    %p417 = scmp.eq.s32.totalorder %s24, 3
    %p418 = por %p416, %p417
    %p419 = scmp.ne.s32.totalorder %s411, %s414
    %p420 = scmp.eq.s32.totalorder %s24, 0
    %p421 = por %p419, %p420
    %p422 = scmp.ne.s32.totalorder %s411, %s414
    %p423 = scmp.eq.s32.totalorder %s29, 3
    %p424 = por %p422, %p423
    %p425 = scmp.ne.s32.totalorder %s414, %s415
    %p426 = scmp.eq.s32.totalorder %s29, 0
    %p427 = por %p425, %p426
    %p428 = scmp.ne.s32.totalorder %s414, %s415
    %p429 = scmp.eq.s32.totalorder %s30, 3
    %p430 = por %p428, %p429
    %p432 = scmp.ne.s32.totalorder %s415, %s431
    %p433 = scmp.eq.s32.totalorder %s30, 0
    %p434 = por %p432, %p433
    %p435 = scmp.le.s32.totalorder 1, %s24
    %p436 = scmp.lt.s32.totalorder %s24, 5
    %p437 = pnand %p435, %p436
    %p438 = pneg %p437
    // Predicated region
    $region9: #{egcl_v2a_forward.1} parent=5 // pred_check
      _
    $region10: #{egcl_v2a_forward.1} parent=5 // pred_check_branch
      %440 = sbr.rel (%p437) target = $region12
    $region11: #{egcl_v2a_forward.1} parent=5 // pred_region
      %s441 = ssub.s32 %s24, 1
      // Predicated region
      $region13: #{egcl_v2a_forward.1} parent=11 // pred_check
        %p442 = pneg %p123
      $region14: #{egcl_v2a_forward.1} parent=11 // pred_check_branch
        %444 = sbr.rel (%p442) target = $region16
      $region15: #{egcl_v2a_forward.1} parent=11 // pred_region
        _
      $region16: #{egcl_v2a_forward.1} parent=11 // pred_fallthru
        _
      // Predicated region
      $region17: #{egcl_v2a_forward.1} parent=11 // pred_check
        %p445 = pneg %p144
      $region18: #{egcl_v2a_forward.1} parent=11 // pred_check_branch
        %447 = sbr.rel (%p445) target = $region20
      $region19: #{egcl_v2a_forward.1} parent=11 // pred_region
        _
      $region20: #{egcl_v2a_forward.1} parent=11 // pred_fallthru
        _
      // Predicated region
      $region21: #{egcl_v2a_forward.1} parent=11 // pred_check
        %p448 = pneg %p165
      $region22: #{egcl_v2a_forward.1} parent=11 // pred_check_branch
        %450 = sbr.rel (%p448) target = $region24
      $region23: #{egcl_v2a_forward.1} parent=11 // pred_region
        _
      $region24: #{egcl_v2a_forward.1} parent=11 // pred_fallthru
        _
      // Predicated region
      $region25: #{egcl_v2a_forward.1} parent=11 // pred_check
        %p451 = pneg %p186
      $region26: #{egcl_v2a_forward.1} parent=11 // pred_check_branch
        %453 = sbr.rel (%p451) target = $region28
      $region27: #{egcl_v2a_forward.1} parent=11 // pred_region
        _
      $region28: #{egcl_v2a_forward.1} parent=11 // pred_fallthru
        _
      // Predicated region
      $region29: #{egcl_v2a_forward.1} parent=11 // pred_check
        %p454 = pneg %p207
      $region30: #{egcl_v2a_forward.1} parent=11 // pred_check_branch
        %456 = sbr.rel (%p454) target = $region32
      $region31: #{egcl_v2a_forward.1} parent=11 // pred_region
        _
      $region32: #{egcl_v2a_forward.1} parent=11 // pred_fallthru
        _
      // Predicated region
      $region33: #{egcl_v2a_forward.1} parent=11 // pred_check
        %p457 = pneg %p228
      $region34: #{egcl_v2a_forward.1} parent=11 // pred_check_branch
        %459 = sbr.rel (%p457) target = $region36
      $region35: #{egcl_v2a_forward.1} parent=11 // pred_region
        _
      $region36: #{egcl_v2a_forward.1} parent=11 // pred_fallthru
        _
      // Predicated region
      $region37: #{egcl_v2a_forward.1} parent=11 // pred_check
        %p460 = pneg %p249
      $region38: #{egcl_v2a_forward.1} parent=11 // pred_check_branch
        %462 = sbr.rel (%p460) target = $region40
      $region39: #{egcl_v2a_forward.1} parent=11 // pred_region
        _
      $region40: #{egcl_v2a_forward.1} parent=11 // pred_fallthru
        _
      // Predicated region
      $region41: #{egcl_v2a_forward.1} parent=11 // pred_check
        %p463 = pneg %p270
      $region42: #{egcl_v2a_forward.1} parent=11 // pred_check_branch
        %465 = sbr.rel (%p463) target = $region44
      $region43: #{egcl_v2a_forward.1} parent=11 // pred_region
        _
      $region44: #{egcl_v2a_forward.1} parent=11 // pred_fallthru
        _
      // Predicated region
      $region45: #{egcl_v2a_forward.1} parent=11 // pred_check
        %p466 = pneg %p291
      $region46: #{egcl_v2a_forward.1} parent=11 // pred_check_branch
        %468 = sbr.rel (%p466) target = $region48
      $region47: #{egcl_v2a_forward.1} parent=11 // pred_region
        _
      $region48: #{egcl_v2a_forward.1} parent=11 // pred_fallthru
        _
      // Predicated region
      $region49: #{egcl_v2a_forward.1} parent=11 // pred_check
        %p469 = pneg %p312
      $region50: #{egcl_v2a_forward.1} parent=11 // pred_check_branch
        %471 = sbr.rel (%p469) target = $region52
      $region51: #{egcl_v2a_forward.1} parent=11 // pred_region
        _
      $region52: #{egcl_v2a_forward.1} parent=11 // pred_fallthru
        _
      // Predicated region
      $region53: #{egcl_v2a_forward.1} parent=11 // pred_check
        %p472 = pneg %p333
      $region54: #{egcl_v2a_forward.1} parent=11 // pred_check_branch
        %474 = sbr.rel (%p472) target = $region56
      $region55: #{egcl_v2a_forward.1} parent=11 // pred_region
        _
      $region56: #{egcl_v2a_forward.1} parent=11 // pred_fallthru
        _
      // Predicated region
      $region57: #{egcl_v2a_forward.1} parent=11 // pred_check
        %p475 = pneg %p354
      $region58: #{egcl_v2a_forward.1} parent=11 // pred_check_branch
        %477 = sbr.rel (%p475) target = $region60
      $region59: #{egcl_v2a_forward.1} parent=11 // pred_region
        _
      $region60: #{egcl_v2a_forward.1} parent=11 // pred_fallthru
        _
      // Predicated region
      $region61: #{egcl_v2a_forward.1} parent=11 // pred_check
        %p478 = pneg %p375
      $region62: #{egcl_v2a_forward.1} parent=11 // pred_check_branch
        %480 = sbr.rel (%p478) target = $region64
      $region63: #{egcl_v2a_forward.1} parent=11 // pred_region
        _
      $region64: #{egcl_v2a_forward.1} parent=11 // pred_fallthru
        _
    $region12: #{egcl_v2a_forward.1} parent=5 // pred_fallthru
      _
    %p481 = scmp.lt.s32.totalorder %s24, 4
    // Predicated region
    $region65: #{egcl_v2a_forward.1} parent=5 // pred_check
      %p482 = pneg %p481
    $region66: #{egcl_v2a_forward.1} parent=5 // pred_check_branch
      %484 = sbr.rel (%p482) target = $region68
    $region67: #{egcl_v2a_forward.1} parent=5 // pred_region
      // Predicated region
      $region69: #{egcl_v2a_forward.1} parent=67 // pred_check
        %p485 = pneg %p44
      $region70: #{egcl_v2a_forward.1} parent=67 // pred_check_branch
        %487 = sbr.rel (%p485) target = $region72
      $region71: #{egcl_v2a_forward.1} parent=67 // pred_region
        %s488 = smul.u32 2, %s24
        %p489 = scmp.lt.s32.totalorder %s488, 7
        %s490 = scalar_select %p489, %s488, 7
        %s491 = smul.addr %s490, 8
        %s492 = scalar_lea.vmem %s0, %s491
        %s493 = smul.u32 2, %s24
      $region72: #{egcl_v2a_forward.1} parent=67 // pred_fallthru
        _
      // Predicated region
      $region73: #{egcl_v2a_forward.1} parent=67 // pred_check
        %p494 = pneg %p70
      $region74: #{egcl_v2a_forward.1} parent=67 // pred_check_branch
        %496 = sbr.rel (%p494) target = $region76
      $region75: #{egcl_v2a_forward.1} parent=67 // pred_region
        %s497 = smul.u32 2, %s24
        %p498 = scmp.lt.s32.totalorder %s497, 7
        %s499 = scalar_select %p498, %s497, 7
        %s500 = smul.addr %s499, 8
        %s501 = scalar_lea.vmem %s1, %s500
        %s502 = smul.u32 2, %s24
      $region76: #{egcl_v2a_forward.1} parent=67 // pred_fallthru
        _
      // Predicated region
      $region77: #{egcl_v2a_forward.1} parent=67 // pred_check
        %p503 = pneg %p96
      $region78: #{egcl_v2a_forward.1} parent=67 // pred_check_branch
        %505 = sbr.rel (%p503) target = $region80
      $region79: #{egcl_v2a_forward.1} parent=67 // pred_region
        %s506 = smul.u32 2, %s24
        %p507 = scmp.lt.s32.totalorder %s506, 7
        %s508 = scalar_select %p507, %s506, 7
        %s509 = smul.addr %s508, 8
        %s510 = scalar_lea.vmem %s2, %s509
        %s511 = smul.u32 2, %s24
      $region80: #{egcl_v2a_forward.1} parent=67 // pred_fallthru
        _
    $region68: #{egcl_v2a_forward.1} parent=5 // pred_fallthru
      _
    %p512 = scmp.le.s32.totalorder 1, %s24
    %p513 = scmp.lt.s32.totalorder %s24, 5
    %p514 = pnand %p512, %p513
    %p515 = pneg %p514
    // Predicated region
    $region81: #{egcl_v2a_forward.1} parent=5 // pred_check
      _
    $region82: #{egcl_v2a_forward.1} parent=5 // pred_check_branch
      %517 = sbr.rel (%p514) target = $region84
    $region83: #{egcl_v2a_forward.1} parent=5 // pred_region
      %s518 = ssub.s32 %s24, 1
      %s519 = smul.u32 2, %s29
      %p520 = scmp.lt.s32.totalorder %s519, 7
      %s521 = scalar_select %p520, %s519, 7
      %s522 = smul.addr %s521, 8
      %s523 = scalar_lea.vmem %s0, %s522
      %p524 = pneg %p50
      %p525 = pneg %p47
      %s526 = smul.u32 2, %s29
      %p527 = scmp.lt.s32.totalorder %s526, 7
      %s528 = scalar_select %p527, %s526, 7
      %s529 = smul.addr %s528, 8
      %s530 = scalar_lea.vmem %s1, %s529
      %p531 = pneg %p76
      %p532 = pneg %p73
      %s533 = smul.u32 2, %s29
      %p534 = scmp.lt.s32.totalorder %s533, 7
      %s535 = scalar_select %p534, %s533, 7
      %s536 = smul.addr %s535, 8
      %s537 = scalar_lea.vmem %s2, %s536
      %p538 = pneg %p102
      %p539 = pneg %p99
      %p540 = pneg %p123
      %p541 = pneg %p120
      %p542 = pneg %p144
      %p543 = pneg %p141
      %p544 = pneg %p165
      %p545 = pneg %p162
      %p546 = pneg %p186
      %p547 = pneg %p183
      %p548 = pneg %p207
      %p549 = pneg %p204
      %p550 = pneg %p228
      %p551 = pneg %p225
      %p552 = pneg %p249
      %p553 = pneg %p246
      %p554 = pneg %p270
      %p555 = pneg %p267
      %p556 = pneg %p291
      %p557 = pneg %p288
      %p558 = pneg %p312
      %p559 = pneg %p309
      %p560 = pneg %p333
      %p561 = pneg %p330
      %p562 = pneg %p354
      %p563 = pneg %p351
      %p564 = pneg %p375
      %p565 = pneg %p372
      %p566 = pneg %p401
      %p567 = pneg %p398
      %s568 = smul.u32 2, %s29
      %p569 = scmp.lt.s32.totalorder %s568, 7
      %s570 = scalar_select %p569, %s568, 7
      %s571 = smul.addr %s570, 8
      %s572 = scalar_lea.vmem %s16, %s571
      %p573 = pneg %p427
      %p574 = pneg %p424
      %s575 = smul.u32 2, %s29
      %p576 = scmp.lt.s32.totalorder %s575, 7
      %s577 = scalar_select %p576, %s575, 7
      %s578 = smul.addr %s577, 8
      %s579 = scalar_lea.vmem %s17, %s578
      %s580 = smul.u32 2, %s29
      %p581 = scmp.lt.s32.totalorder %s580, 7
      %s582 = scalar_select %p581, %s580, 7
      %s583 = smul.addr %s582, 8
      %s584 = scalar_lea.vmem %s0, %s583
      %s585 = smul.u32 2, %s29
      %s586 = smul.u32 2, %s29
      %p587 = scmp.lt.s32.totalorder %s586, 7
      %s588 = scalar_select %p587, %s586, 7
      %s589 = smul.addr %s588, 8
      %s590 = scalar_lea.vmem %s1, %s589
      %s591 = smul.u32 2, %s29
      %s592 = smul.u32 2, %s29
      %p593 = scmp.lt.s32.totalorder %s592, 7
      %s594 = scalar_select %p593, %s592, 7
      %s595 = smul.addr %s594, 8
      %s596 = scalar_lea.vmem %s2, %s595
      %s597 = smul.u32 2, %s29
      %s598 = smul.u32 2, %s29
      %p599 = scmp.lt.s32.totalorder %s598, 7
      %s600 = scalar_select %p599, %s598, 7
      %s601 = smul.addr %s600, 8
      %s602 = scalar_lea.vmem %s16, %s601
      %s603 = smul.u32 2, %s29
      %s604 = smul.u32 2, %s29
      %p605 = scmp.lt.s32.totalorder %s604, 7
      %s606 = scalar_select %p605, %s604, 7
      %s607 = smul.addr %s606, 8
      %s608 = scalar_lea.vmem %s17, %s607
      %s609 = smul.u32 2, %s29
      %v610 = vld [vmem:[%s584] sm:$0xff]
      %v611 = vld [vmem:[%s584 + $0x8] sm:$0xff]
      %v612 = vld [vmem:[%s590] sm:$0xff]
      %v613 = vld [vmem:[%s590 + $0x8] sm:$0xff]
      %v614 = vld [vmem:[%s596] sm:$0xff]
      %v615 = vld [vmem:[%s596 + $0x8] sm:$0xff]
      %v616 = vlaneseq
      %v617 = vand.u32 %v616, 127
      %618 = vset.pattern.permute.xlu0 0
      %619 = vperm.xlu0 %618, %v610
      %v620 = vpop.permute.xlu0 %619
      %621 = vset.pattern.permute.xlu0 0
      %622 = vperm.xlu0 %621, %v611
      %v623 = vpop.permute.xlu0 %622
      %vm624 = vcmp.eq.s32.totalorder %v620, %v617
      %vm625 = vcmp.eq.s32.totalorder %v623, %v617
      %v626 = vsel %vm624, 1, 0
      %v627 = vsel %vm625, 1, 0
      %v628 = vcvt.s32.f32 %v626
      %v629 = vcvt.s32.f32 %v627
      %v630 = vld [vmem:[%s3] sm:$0xff]
      %v631 = vld [vmem:[%s3 + $0x8] sm:$0xff]
      %v632 = vld [vmem:[%s3 + $0x10] sm:$0xff]
      %v633 = vld [vmem:[%s3 + $0x18] sm:$0xff]
      %v634 = vld [vmem:[%s3 + $0x20] sm:$0xff]
      %v635 = vld [vmem:[%s3 + $0x28] sm:$0xff]
      %v636 = vld [vmem:[%s3 + $0x30] sm:$0xff]
      %v637 = vld [vmem:[%s3 + $0x38] sm:$0xff]
      %vm638 = vcmask 64512
      %v640 = vsel %vm638, %v628, 0
      %v643 = vsel %vm638, %v629, 0
      %645 = vmatprep.subr.mxu0 0.0
      %646 = vmatpush1.msra.mxu0 0.0
      %647 = vmatprep.subr.mxu0 0.0
      %648 = vmatpush1.msra.mxu0 0.0
      %649 = vmatprep.subr.mxu0 0.0
      %650 = vmatpush1.msra.mxu0 0.0
      %651 = vmatprep.subr.mxu0 0.0
      %652 = vmatpush1.msra.mxu0 0.0
      %653 = vmatprep.subr.mxu0 0.0
      %654 = vmatpush1.msra.mxu0 0.0
      %655 = vmatprep.subr.mxu0 0.0
      %656 = vmatpush1.msra.mxu0 0.0
      %657 = vmatprep.subr.mxu0 0.0
      %658 = vmatpush1.msra.mxu0 0.0
      %659 = vmatprep.subr.mxu0 0.0
      %660 = vmatpush1.msra.mxu0 0.0
      %661 = vmatprep.subr.mxu0 0.0
      %662 = vmatpush1.msra.mxu0 0.0
      %663 = vmatprep.subr.mxu0 0.0
      %664 = vmatpush1.msra.mxu0 0.0
      %665 = vmatprep.subr.mxu0 0.0
      %666 = vmatpush1.msra.mxu0 0.0
      %667 = vmatprep.subr.mxu0 0.0
      %668 = vmatpush1.msra.mxu0 0.0
      %669 = vmatprep.subr.mxu0 0.0
      %670 = vmatpush1.msra.mxu0 0.0
      %671 = vmatprep.subr.mxu0 0.0
      %672 = vmatpush1.msra.mxu0 0.0
      %673 = vmatprep.subr.mxu0 0.0
      %674 = vmatpush1.msra.mxu0 0.0
      %675 = vmatprep.subr.mxu0 %v631
      %676 = vmatpush1.msra.mxu0 %v630
      %677 = vmatprep.subr.mxu0 0.0
      %678 = vmatpush2.msra.mxu0 0.0
      %679 = vmatprep.subr.mxu0 0.0
      %680 = vmatpush2.msra.mxu0 0.0
      %681 = vmatprep.subr.mxu0 0.0
      %682 = vmatpush2.msra.mxu0 0.0
      %683 = vmatprep.subr.mxu0 0.0
      %684 = vmatpush2.msra.mxu0 0.0
      %685 = vmatprep.subr.mxu0 0.0
      %686 = vmatpush2.msra.mxu0 0.0
      %687 = vmatprep.subr.mxu0 0.0
      %688 = vmatpush2.msra.mxu0 0.0
      %689 = vmatprep.subr.mxu0 0.0
      %690 = vmatpush2.msra.mxu0 0.0
      %691 = vmatprep.subr.mxu0 0.0
      %692 = vmatpush2.msra.mxu0 0.0
      %693 = vmatprep.subr.mxu0 0.0
      %694 = vmatpush2.msra.mxu0 0.0
      %695 = vmatprep.subr.mxu0 0.0
      %696 = vmatpush2.msra.mxu0 0.0
      %697 = vmatprep.subr.mxu0 0.0
      %698 = vmatpush2.msra.mxu0 0.0
      %699 = vmatprep.subr.mxu0 0.0
      %700 = vmatpush2.msra.mxu0 0.0
      %701 = vmatprep.subr.mxu0 0.0
      %702 = vmatpush2.msra.mxu0 0.0
      %703 = vmatprep.subr.mxu0 0.0
      %704 = vmatpush2.msra.mxu0 0.0
      %705 = vmatprep.subr.mxu0 0.0
      %706 = vmatpush2.msra.mxu0 0.0
      %707 = vmatprep.subr.mxu0 0.0
      %708 = vmatpush2.msra.mxu0 0.0
      %709 = vmatprep.mubr.f32.mxu0 0.0
      %710 = vmatmul.mubr.f32.gmra.mxu0 %v640
      %v711 = vpop.f32.mrf.mxu0
      %v712 = vadd.f32 0.0, %v711
      %v713 = vpop.f32.mrf.mxu0
      %v714 = vadd.f32 0.0, %v713
      %715 = vmatprep.mubr.f32.mxu0 0.0
      %716 = vmatmul.mubr.f32.gmra.mxu0 %v643
      %v717 = vpop.f32.mrf.mxu0
      %v718 = vadd.f32 0.0, %v717
      %v719 = vpop.f32.mrf.mxu0
      %v720 = vadd.f32 0.0, %v719
      %721 = vdwg.mxu0
      %722 = vmatprep.subr.mxu0 0.0
      %723 = vmatpush1.msra.mxu0 0.0
      %724 = vmatprep.subr.mxu0 0.0
      %725 = vmatpush1.msra.mxu0 0.0
      %726 = vmatprep.subr.mxu0 0.0
      %727 = vmatpush1.msra.mxu0 0.0
      %728 = vmatprep.subr.mxu0 0.0
      %729 = vmatpush1.msra.mxu0 0.0
      %730 = vmatprep.subr.mxu0 0.0
      %731 = vmatpush1.msra.mxu0 0.0
      %732 = vmatprep.subr.mxu0 0.0
      %733 = vmatpush1.msra.mxu0 0.0
      %734 = vmatprep.subr.mxu0 0.0
      %735 = vmatpush1.msra.mxu0 0.0
      %736 = vmatprep.subr.mxu0 0.0
      %737 = vmatpush1.msra.mxu0 0.0
      %738 = vmatprep.subr.mxu0 0.0
      %739 = vmatpush1.msra.mxu0 0.0
      %740 = vmatprep.subr.mxu0 0.0
      %741 = vmatpush1.msra.mxu0 0.0
      %742 = vmatprep.subr.mxu0 0.0
      %743 = vmatpush1.msra.mxu0 0.0
      %744 = vmatprep.subr.mxu0 0.0
      %745 = vmatpush1.msra.mxu0 0.0
      %746 = vmatprep.subr.mxu0 0.0
      %747 = vmatpush1.msra.mxu0 0.0
      %748 = vmatprep.subr.mxu0 0.0
      %749 = vmatpush1.msra.mxu0 0.0
      %750 = vmatprep.subr.mxu0 0.0
      %751 = vmatpush1.msra.mxu0 0.0
      %752 = vmatprep.subr.mxu0 %v633
      %753 = vmatpush1.msra.mxu0 %v632
      %754 = vmatprep.subr.mxu0 0.0
      %755 = vmatpush2.msra.mxu0 0.0
      %756 = vmatprep.subr.mxu0 0.0
      %757 = vmatpush2.msra.mxu0 0.0
      %758 = vmatprep.subr.mxu0 0.0
      %759 = vmatpush2.msra.mxu0 0.0
      %760 = vmatprep.subr.mxu0 0.0
      %761 = vmatpush2.msra.mxu0 0.0
      %762 = vmatprep.subr.mxu0 0.0
      %763 = vmatpush2.msra.mxu0 0.0
      %764 = vmatprep.subr.mxu0 0.0
      %765 = vmatpush2.msra.mxu0 0.0
      %766 = vmatprep.subr.mxu0 0.0
      %767 = vmatpush2.msra.mxu0 0.0
      %768 = vmatprep.subr.mxu0 0.0
      %769 = vmatpush2.msra.mxu0 0.0
      %770 = vmatprep.subr.mxu0 0.0
      %771 = vmatpush2.msra.mxu0 0.0
      %772 = vmatprep.subr.mxu0 0.0
      %773 = vmatpush2.msra.mxu0 0.0
      %774 = vmatprep.subr.mxu0 0.0
      %775 = vmatpush2.msra.mxu0 0.0
      %776 = vmatprep.subr.mxu0 0.0
      %777 = vmatpush2.msra.mxu0 0.0
      %778 = vmatprep.subr.mxu0 0.0
      %779 = vmatpush2.msra.mxu0 0.0
      %780 = vmatprep.subr.mxu0 0.0
      %781 = vmatpush2.msra.mxu0 0.0
      %782 = vmatprep.subr.mxu0 0.0
      %783 = vmatpush2.msra.mxu0 0.0
      %784 = vmatprep.subr.mxu0 0.0
      %785 = vmatpush2.msra.mxu0 0.0
      %786 = vmatprep.mubr.f32.mxu0 0.0
      %787 = vmatmul.mubr.f32.gmra.mxu0 %v640
      %v788 = vpop.f32.mrf.mxu0
      %v789 = vadd.f32 0.0, %v788
      %v790 = vpop.f32.mrf.mxu0
      %v791 = vadd.f32 0.0, %v790
      %792 = vmatprep.mubr.f32.mxu0 0.0
      %793 = vmatmul.mubr.f32.gmra.mxu0 %v643
      %v794 = vpop.f32.mrf.mxu0
      %v795 = vadd.f32 0.0, %v794
      %v796 = vpop.f32.mrf.mxu0
      %v797 = vadd.f32 0.0, %v796
      %798 = vdwg.mxu0
      %799 = vmatprep.subr.mxu0 0.0
      %800 = vmatpush1.msra.mxu0 0.0
      %801 = vmatprep.subr.mxu0 0.0
      %802 = vmatpush1.msra.mxu0 0.0
      %803 = vmatprep.subr.mxu0 0.0
      %804 = vmatpush1.msra.mxu0 0.0
      %805 = vmatprep.subr.mxu0 0.0
      %806 = vmatpush1.msra.mxu0 0.0
      %807 = vmatprep.subr.mxu0 0.0
      %808 = vmatpush1.msra.mxu0 0.0
      %809 = vmatprep.subr.mxu0 0.0
      %810 = vmatpush1.msra.mxu0 0.0
      %811 = vmatprep.subr.mxu0 0.0
      %812 = vmatpush1.msra.mxu0 0.0
      %813 = vmatprep.subr.mxu0 0.0
      %814 = vmatpush1.msra.mxu0 0.0
      %815 = vmatprep.subr.mxu0 0.0
      %816 = vmatpush1.msra.mxu0 0.0
      %817 = vmatprep.subr.mxu0 0.0
      %818 = vmatpush1.msra.mxu0 0.0
      %819 = vmatprep.subr.mxu0 0.0
      %820 = vmatpush1.msra.mxu0 0.0
      %821 = vmatprep.subr.mxu0 0.0
      %822 = vmatpush1.msra.mxu0 0.0
      %823 = vmatprep.subr.mxu0 0.0
      %824 = vmatpush1.msra.mxu0 0.0
      %825 = vmatprep.subr.mxu0 0.0
      %826 = vmatpush1.msra.mxu0 0.0
      %827 = vmatprep.subr.mxu0 0.0
      %828 = vmatpush1.msra.mxu0 0.0
      %829 = vmatprep.subr.mxu0 %v635
      %830 = vmatpush1.msra.mxu0 %v634
      %831 = vmatprep.subr.mxu0 0.0
      %832 = vmatpush2.msra.mxu0 0.0
      %833 = vmatprep.subr.mxu0 0.0
      %834 = vmatpush2.msra.mxu0 0.0
      %835 = vmatprep.subr.mxu0 0.0
      %836 = vmatpush2.msra.mxu0 0.0
      %837 = vmatprep.subr.mxu0 0.0
      %838 = vmatpush2.msra.mxu0 0.0
      %839 = vmatprep.subr.mxu0 0.0
      %840 = vmatpush2.msra.mxu0 0.0
      %841 = vmatprep.subr.mxu0 0.0
      %842 = vmatpush2.msra.mxu0 0.0
      %843 = vmatprep.subr.mxu0 0.0
      %844 = vmatpush2.msra.mxu0 0.0
      %845 = vmatprep.subr.mxu0 0.0
      %846 = vmatpush2.msra.mxu0 0.0
      %847 = vmatprep.subr.mxu0 0.0
      %848 = vmatpush2.msra.mxu0 0.0
      %849 = vmatprep.subr.mxu0 0.0
      %850 = vmatpush2.msra.mxu0 0.0
      %851 = vmatprep.subr.mxu0 0.0
      %852 = vmatpush2.msra.mxu0 0.0
      %853 = vmatprep.subr.mxu0 0.0
      %854 = vmatpush2.msra.mxu0 0.0
      %855 = vmatprep.subr.mxu0 0.0
      %856 = vmatpush2.msra.mxu0 0.0
      %857 = vmatprep.subr.mxu0 0.0
      %858 = vmatpush2.msra.mxu0 0.0
      %859 = vmatprep.subr.mxu0 0.0
      %860 = vmatpush2.msra.mxu0 0.0
      %861 = vmatprep.subr.mxu0 0.0
      %862 = vmatpush2.msra.mxu0 0.0
      %863 = vmatprep.mubr.f32.mxu0 0.0
      %864 = vmatmul.mubr.f32.gmra.mxu0 %v640
      %v865 = vpop.f32.mrf.mxu0
      %v866 = vadd.f32 0.0, %v865
      %v867 = vpop.f32.mrf.mxu0
      %v868 = vadd.f32 0.0, %v867
      %869 = vmatprep.mubr.f32.mxu0 0.0
      %870 = vmatmul.mubr.f32.gmra.mxu0 %v643
      %v871 = vpop.f32.mrf.mxu0
      %v872 = vadd.f32 0.0, %v871
      %v873 = vpop.f32.mrf.mxu0
      %v874 = vadd.f32 0.0, %v873
      %875 = vdwg.mxu0
      %876 = vmatprep.subr.mxu0 0.0
      %877 = vmatpush1.msra.mxu0 0.0
      %878 = vmatprep.subr.mxu0 0.0
      %879 = vmatpush1.msra.mxu0 0.0
      %880 = vmatprep.subr.mxu0 0.0
      %881 = vmatpush1.msra.mxu0 0.0
      %882 = vmatprep.subr.mxu0 0.0
      %883 = vmatpush1.msra.mxu0 0.0
      %884 = vmatprep.subr.mxu0 0.0
      %885 = vmatpush1.msra.mxu0 0.0
      %886 = vmatprep.subr.mxu0 0.0
      %887 = vmatpush1.msra.mxu0 0.0
      %888 = vmatprep.subr.mxu0 0.0
      %889 = vmatpush1.msra.mxu0 0.0
      %890 = vmatprep.subr.mxu0 0.0
      %891 = vmatpush1.msra.mxu0 0.0
      %892 = vmatprep.subr.mxu0 0.0
      %893 = vmatpush1.msra.mxu0 0.0
      %894 = vmatprep.subr.mxu0 0.0
      %895 = vmatpush1.msra.mxu0 0.0
      %896 = vmatprep.subr.mxu0 0.0
      %897 = vmatpush1.msra.mxu0 0.0
      %898 = vmatprep.subr.mxu0 0.0
      %899 = vmatpush1.msra.mxu0 0.0
      %900 = vmatprep.subr.mxu0 0.0
      %901 = vmatpush1.msra.mxu0 0.0
      %902 = vmatprep.subr.mxu0 0.0
      %903 = vmatpush1.msra.mxu0 0.0
      %904 = vmatprep.subr.mxu0 0.0
      %905 = vmatpush1.msra.mxu0 0.0
      %906 = vmatprep.subr.mxu0 %v637
      %907 = vmatpush1.msra.mxu0 %v636
      %908 = vmatprep.subr.mxu0 0.0
      %909 = vmatpush2.msra.mxu0 0.0
      %910 = vmatprep.subr.mxu0 0.0
      %911 = vmatpush2.msra.mxu0 0.0
      %912 = vmatprep.subr.mxu0 0.0
      %913 = vmatpush2.msra.mxu0 0.0
      %914 = vmatprep.subr.mxu0 0.0
      %915 = vmatpush2.msra.mxu0 0.0
      %916 = vmatprep.subr.mxu0 0.0
      %917 = vmatpush2.msra.mxu0 0.0
      %918 = vmatprep.subr.mxu0 0.0
      %919 = vmatpush2.msra.mxu0 0.0
      %920 = vmatprep.subr.mxu0 0.0
      %921 = vmatpush2.msra.mxu0 0.0
      %922 = vmatprep.subr.mxu0 0.0
      %923 = vmatpush2.msra.mxu0 0.0
      %924 = vmatprep.subr.mxu0 0.0
      %925 = vmatpush2.msra.mxu0 0.0
      %926 = vmatprep.subr.mxu0 0.0
      %927 = vmatpush2.msra.mxu0 0.0
      %928 = vmatprep.subr.mxu0 0.0
      %929 = vmatpush2.msra.mxu0 0.0
      %930 = vmatprep.subr.mxu0 0.0
      %931 = vmatpush2.msra.mxu0 0.0
      %932 = vmatprep.subr.mxu0 0.0
      %933 = vmatpush2.msra.mxu0 0.0
      %934 = vmatprep.subr.mxu0 0.0
      %935 = vmatpush2.msra.mxu0 0.0
      %936 = vmatprep.subr.mxu0 0.0
      %937 = vmatpush2.msra.mxu0 0.0
      %938 = vmatprep.subr.mxu0 0.0
      %939 = vmatpush2.msra.mxu0 0.0
      %940 = vmatprep.mubr.f32.mxu0 0.0
      %941 = vmatmul.mubr.f32.gmra.mxu0 %v640
      %v942 = vpop.f32.mrf.mxu0
      %v943 = vadd.f32 0.0, %v942
      %v944 = vpop.f32.mrf.mxu0
      %v945 = vadd.f32 0.0, %v944
      %946 = vmatprep.mubr.f32.mxu0 0.0
      %947 = vmatmul.mubr.f32.gmra.mxu0 %v643
      %v948 = vpop.f32.mrf.mxu0
      %v949 = vadd.f32 0.0, %v948
      %v950 = vpop.f32.mrf.mxu0
      %v951 = vadd.f32 0.0, %v950
      %952 = vdwg.mxu0
      %v953 = vsub.f32 %v714, %v614
      %v954 = vsub.f32 %v720, %v615
      %v955 = vsub.f32 %v791, %v614
      %v956 = vsub.f32 %v797, %v615
      %v957 = vsub.f32 %v868, %v614
      %v958 = vsub.f32 %v874, %v615
      %v959 = vsub.f32 %v945, %v614
      %v960 = vsub.f32 %v951, %v615
      %v961 = vmul.f32 %v953, %v953
      %v962 = vmul.f32 %v954, %v954
      %v963 = vmul.f32 %v955, %v955
      %v964 = vmul.f32 %v956, %v956
      %v965 = vmul.f32 %v957, %v957
      %v966 = vmul.f32 %v958, %v958
      %v967 = vmul.f32 %v959, %v959
      %v968 = vmul.f32 %v960, %v960
      %vm969 = vcmask 23552
      %v970 = vsel %vm969, %v961, 0.0
      %971 = vadd.xlane.f32.xlu0 %v970
      %v972 = vpop.xlane.xlu0 %971
      %v973 = vsel %vm969, %v962, 0.0
      %974 = vadd.xlane.f32.xlu0 %v973
      %v975 = vpop.xlane.xlu0 %974
      %v976 = vsel %vm969, %v963, 0.0
      %977 = vadd.xlane.f32.xlu0 %v976
      %v978 = vpop.xlane.xlu0 %977
      %v979 = vsel %vm969, %v964, 0.0
      %980 = vadd.xlane.f32.xlu0 %v979
      %v981 = vpop.xlane.xlu0 %980
      %v982 = vsel %vm969, %v965, 0.0
      %983 = vadd.xlane.f32.xlu0 %v982
      %v984 = vpop.xlane.xlu0 %983
      %v985 = vsel %vm969, %v966, 0.0
      %986 = vadd.xlane.f32.xlu0 %v985
      %v987 = vpop.xlane.xlu0 %986
      %v988 = vsel %vm969, %v967, 0.0
      %989 = vadd.xlane.f32.xlu0 %v988
      %v990 = vpop.xlane.xlu0 %989
      %v991 = vsel %vm969, %v968, 0.0
      %992 = vadd.xlane.f32.xlu0 %v991
      %v993 = vpop.xlane.xlu0 %992
      %v994 = vrsqrt.pop %v972
      %v995 = vmul.f32 %v972, %v994
      %vm996 = vcmp.eq.f32.partialorder %v972, inf
      %v997 = vsel %vm996, %v972, %v995
      %vm998 = vcmp.eq.f32.partialorder %v972, 0.0
      %v999 = vand.u32 %v972, 2147483648
      %v1000 = vsel %vm998, %v999, %v997
      %v1001 = vrsqrt.pop %v975
      %v1002 = vmul.f32 %v975, %v1001
      %vm1003 = vcmp.eq.f32.partialorder %v975, inf
      %v1004 = vsel %vm1003, %v975, %v1002
      %vm1005 = vcmp.eq.f32.partialorder %v975, 0.0
      %v1006 = vand.u32 %v975, 2147483648
      %v1007 = vsel %vm1005, %v1006, %v1004
      %v1008 = vrsqrt.pop %v978
      %v1009 = vmul.f32 %v978, %v1008
      %vm1010 = vcmp.eq.f32.partialorder %v978, inf
      %v1011 = vsel %vm1010, %v978, %v1009
      %vm1012 = vcmp.eq.f32.partialorder %v978, 0.0
      %v1013 = vand.u32 %v978, 2147483648
      %v1014 = vsel %vm1012, %v1013, %v1011
      %v1015 = vrsqrt.pop %v981
      %v1016 = vmul.f32 %v981, %v1015
      %vm1017 = vcmp.eq.f32.partialorder %v981, inf
      %v1018 = vsel %vm1017, %v981, %v1016
      %vm1019 = vcmp.eq.f32.partialorder %v981, 0.0
      %v1020 = vand.u32 %v981, 2147483648
      %v1021 = vsel %vm1019, %v1020, %v1018
      %v1022 = vrsqrt.pop %v984
      %v1023 = vmul.f32 %v984, %v1022
      %vm1024 = vcmp.eq.f32.partialorder %v984, inf
      %v1025 = vsel %vm1024, %v984, %v1023
      %vm1026 = vcmp.eq.f32.partialorder %v984, 0.0
      %v1027 = vand.u32 %v984, 2147483648
      %v1028 = vsel %vm1026, %v1027, %v1025
      %v1029 = vrsqrt.pop %v987
      %v1030 = vmul.f32 %v987, %v1029
      %vm1031 = vcmp.eq.f32.partialorder %v987, inf
      %v1032 = vsel %vm1031, %v987, %v1030
      %vm1033 = vcmp.eq.f32.partialorder %v987, 0.0
      %v1034 = vand.u32 %v987, 2147483648
      %v1035 = vsel %vm1033, %v1034, %v1032
      %v1036 = vrsqrt.pop %v990
      %v1037 = vmul.f32 %v990, %v1036
      %vm1038 = vcmp.eq.f32.partialorder %v990, inf
      %v1039 = vsel %vm1038, %v990, %v1037
      %vm1040 = vcmp.eq.f32.partialorder %v990, 0.0
      %v1041 = vand.u32 %v990, 2147483648
      %v1042 = vsel %vm1040, %v1041, %v1039
      %v1043 = vrsqrt.pop %v993
      %v1044 = vmul.f32 %v993, %v1043
      %vm1045 = vcmp.eq.f32.partialorder %v993, inf
      %v1046 = vsel %vm1045, %v993, %v1044
      %vm1047 = vcmp.eq.f32.partialorder %v993, 0.0
      %v1048 = vand.u32 %v993, 2147483648
      %v1049 = vsel %vm1047, %v1048, %v1046
      %v1050 = vld [vmem:[%s4] sm:$0xff]
      %v1051 = vld [vmem:[%s4 + $0x8] sm:$0xff]
      %v1052 = vld [vmem:[%s4 + $0x10] sm:$0xff]
      %v1053 = vld [vmem:[%s4 + $0x18] sm:$0xff]
      %v1054 = vld [vmem:[%s4 + $0x20] sm:$0xff]
      %v1055 = vld [vmem:[%s4 + $0x28] sm:$0xff]
      %v1056 = vld [vmem:[%s4 + $0x30] sm:$0xff]
      %v1057 = vld [vmem:[%s4 + $0x38] sm:$0xff]
      %v1058 = vld [vmem:[%s4 + $0x40] sm:$0xff]
      %v1059 = vld [vmem:[%s4 + $0x48] sm:$0xff]
      %v1060 = vld [vmem:[%s4 + $0x50] sm:$0xff]
      %v1061 = vld [vmem:[%s4 + $0x58] sm:$0xff]
      %v1062 = vld [vmem:[%s4 + $0x60] sm:$0xff]
      %v1063 = vld [vmem:[%s4 + $0x68] sm:$0xff]
      %v1064 = vld [vmem:[%s4 + $0x70] sm:$0xff]
      %v1065 = vld [vmem:[%s4 + $0x78] sm:$0xff]
      %v1066 = vld [vmem:[%s6] sm:$0x1]
      %v1068 = vlaneseq
      %v1069 = vshrl.u32 %v1068, 7
      %v1070 = vsub.s32 0, %v1069
      %v1071 = vrot.slane %v1066, %v1070
      %1073 = vmatprep.subr.mxu0 0.0
      %1074 = vmatpush1.msra.mxu0 %v1065
      %1075 = vmatprep.subr.mxu0 0.0
      %1076 = vmatpush1.msra.mxu0 %v1064
      %1077 = vmatprep.subr.mxu0 0.0
      %1078 = vmatpush1.msra.mxu0 %v1063
      %1079 = vmatprep.subr.mxu0 0.0
      %1080 = vmatpush1.msra.mxu0 %v1062
      %1081 = vmatprep.subr.mxu0 0.0
      %1082 = vmatpush1.msra.mxu0 %v1061
      %1083 = vmatprep.subr.mxu0 0.0
      %1084 = vmatpush1.msra.mxu0 %v1060
      %1085 = vmatprep.subr.mxu0 0.0
      %1086 = vmatpush1.msra.mxu0 %v1059
      %1087 = vmatprep.subr.mxu0 0.0
      %1088 = vmatpush1.msra.mxu0 %v1058
      %1089 = vmatprep.subr.mxu0 0.0
      %1090 = vmatpush1.msra.mxu0 %v1057
      %1091 = vmatprep.subr.mxu0 0.0
      %1092 = vmatpush1.msra.mxu0 %v1056
      %1093 = vmatprep.subr.mxu0 0.0
      %1094 = vmatpush1.msra.mxu0 %v1055
      %1095 = vmatprep.subr.mxu0 0.0
      %1096 = vmatpush1.msra.mxu0 %v1054
      %1097 = vmatprep.subr.mxu0 0.0
      %1098 = vmatpush1.msra.mxu0 %v1053
      %1099 = vmatprep.subr.mxu0 0.0
      %1100 = vmatpush1.msra.mxu0 %v1052
      %1101 = vmatprep.subr.mxu0 0.0
      %1102 = vmatpush1.msra.mxu0 %v1051
      %1103 = vmatprep.subr.mxu0 0.0
      %1104 = vmatpush1.msra.mxu0 %v1050
      %1105 = vmatprep.subr.mxu0 0.0
      %1106 = vmatpush2.msra.mxu0 0.0
      %1107 = vmatprep.subr.mxu0 0.0
      %1108 = vmatpush2.msra.mxu0 0.0
      %1109 = vmatprep.subr.mxu0 0.0
      %1110 = vmatpush2.msra.mxu0 0.0
      %1111 = vmatprep.subr.mxu0 0.0
      %1112 = vmatpush2.msra.mxu0 0.0
      %1113 = vmatprep.subr.mxu0 0.0
      %1114 = vmatpush2.msra.mxu0 0.0
      %1115 = vmatprep.subr.mxu0 0.0
      %1116 = vmatpush2.msra.mxu0 0.0
      %1117 = vmatprep.subr.mxu0 0.0
      %1118 = vmatpush2.msra.mxu0 0.0
      %1119 = vmatprep.subr.mxu0 0.0
      %1120 = vmatpush2.msra.mxu0 0.0
      %1121 = vmatprep.subr.mxu0 0.0
      %1122 = vmatpush2.msra.mxu0 0.0
      %1123 = vmatprep.subr.mxu0 0.0
      %1124 = vmatpush2.msra.mxu0 0.0
      %1125 = vmatprep.subr.mxu0 0.0
      %1126 = vmatpush2.msra.mxu0 0.0
      %1127 = vmatprep.subr.mxu0 0.0
      %1128 = vmatpush2.msra.mxu0 0.0
      %1129 = vmatprep.subr.mxu0 0.0
      %1130 = vmatpush2.msra.mxu0 0.0
      %1131 = vmatprep.subr.mxu0 0.0
      %1132 = vmatpush2.msra.mxu0 0.0
      %1133 = vmatprep.subr.mxu0 0.0
      %1134 = vmatpush2.msra.mxu0 0.0
      %1135 = vmatprep.subr.mxu0 0.0
      %1136 = vmatpush2.msra.mxu0 0.0
      %1137 = vmatprep.mubr.f32.mxu0 0.0
      %1138 = vmatmul.mubr.f32.gmra.mxu0 %v612
      %v1139 = vpop.f32.mrf.mxu0
      %v1140 = vadd.f32 %v1071, %v1139
      %v1141 = vpop.f32.mrf.mxu0
      %1142 = vmatprep.mubr.f32.mxu0 0.0
      %1143 = vmatmul.mubr.f32.gmra.mxu0 %v613
      %v1144 = vpop.f32.mrf.mxu0
      %v1145 = vadd.f32 %v1071, %v1144
      %v1146 = vpop.f32.mrf.mxu0
      %1147 = vdwg.mxu0
      %v1148 = vld [vmem:[%s5] sm:$0x1]
      %v1150 = vlaneseq
      %v1151 = vshrl.u32 %v1150, 7
      %v1152 = vsub.s32 0, %v1151
      %v1153 = vrot.slane %v1148, %v1152
      %v1155 = vmul.f32 %v1000, %v1153
      %v1156 = vmul.f32 %v1007, %v1153
      %v1157 = vmul.f32 %v1014, %v1153
      %v1158 = vmul.f32 %v1021, %v1153
      %v1159 = vmul.f32 %v1028, %v1153
      %v1160 = vmul.f32 %v1035, %v1153
      %v1161 = vmul.f32 %v1042, %v1153
      %v1162 = vmul.f32 %v1049, %v1153
      %v1163 = vadd.f32 %v712, %v1155
      %v1164 = vadd.f32 %v718, %v1156
      %v1165 = vadd.f32 %v789, %v1157
      %v1166 = vadd.f32 %v795, %v1158
      %v1167 = vadd.f32 %v866, %v1159
      %v1168 = vadd.f32 %v872, %v1160
      %v1169 = vadd.f32 %v943, %v1161
      %v1170 = vadd.f32 %v949, %v1162
      %v1171 = vadd.f32 %v1163, %v1140
      %v1172 = vadd.f32 %v1164, %v1145
      %v1173 = vadd.f32 %v1165, %v1140
      %v1174 = vadd.f32 %v1166, %v1145
      %v1175 = vadd.f32 %v1167, %v1140
      %v1176 = vadd.f32 %v1168, %v1145
      %v1177 = vadd.f32 %v1169, %v1140
      %v1178 = vadd.f32 %v1170, %v1145
      %v1179 = vxor.u32 %v1171, 2147483648
      %v1180 = vxor.u32 %v1172, 2147483648
      %v1181 = vxor.u32 %v1173, 2147483648
      %v1182 = vxor.u32 %v1174, 2147483648
      %v1183 = vxor.u32 %v1175, 2147483648
      %v1184 = vxor.u32 %v1176, 2147483648
      %v1185 = vxor.u32 %v1177, 2147483648
      %v1186 = vxor.u32 %v1178, 2147483648
      %v1187 = vmul.f32 %v1179, 1.442695
      %v1188 = vpow.pop %v1187
      %v1189 = vmul.f32 %v1180, 1.442695
      %v1190 = vpow.pop %v1189
      %v1191 = vmul.f32 %v1181, 1.442695
      %v1192 = vpow.pop %v1191
      %v1193 = vmul.f32 %v1182, 1.442695
      %v1194 = vpow.pop %v1193
      %v1195 = vmul.f32 %v1183, 1.442695
      %v1196 = vpow.pop %v1195
      %v1197 = vmul.f32 %v1184, 1.442695
      %v1198 = vpow.pop %v1197
      %v1199 = vmul.f32 %v1185, 1.442695
      %v1200 = vpow.pop %v1199
      %v1201 = vmul.f32 %v1186, 1.442695
      %v1202 = vpow.pop %v1201
      %v1203 = vadd.f32 %v1188, 1.0
      %v1204 = vadd.f32 %v1190, 1.0
      %v1205 = vadd.f32 %v1192, 1.0
      %v1206 = vadd.f32 %v1194, 1.0
      %v1207 = vadd.f32 %v1196, 1.0
      %v1208 = vadd.f32 %v1198, 1.0
      %v1209 = vadd.f32 %v1200, 1.0
      %v1210 = vadd.f32 %v1202, 1.0
      %v1211 = vrcp.pop %v1203
      %v1212 = vmul.f32 1.0, %v1211
      %v1213 = vrcp.pop %v1204
      %v1214 = vmul.f32 1.0, %v1213
      %v1215 = vrcp.pop %v1205
      %v1216 = vmul.f32 1.0, %v1215
      %v1217 = vrcp.pop %v1206
      %v1218 = vmul.f32 1.0, %v1217
      %v1219 = vrcp.pop %v1207
      %v1220 = vmul.f32 1.0, %v1219
      %v1221 = vrcp.pop %v1208
      %v1222 = vmul.f32 1.0, %v1221
      %v1223 = vrcp.pop %v1209
      %v1224 = vmul.f32 1.0, %v1223
      %v1225 = vrcp.pop %v1210
      %v1226 = vmul.f32 1.0, %v1225
      %v1227 = vmul.f32 %v1171, %v1212
      %v1228 = vmul.f32 %v1172, %v1214
      %v1229 = vmul.f32 %v1173, %v1216
      %v1230 = vmul.f32 %v1174, %v1218
      %v1231 = vmul.f32 %v1175, %v1220
      %v1232 = vmul.f32 %v1176, %v1222
      %v1233 = vmul.f32 %v1177, %v1224
      %v1234 = vmul.f32 %v1178, %v1226
      %v1235 = vld [vmem:[%s7] sm:$0xff]
      %v1236 = vld [vmem:[%s7 + $0x8] sm:$0xff]
      %v1237 = vld [vmem:[%s7 + $0x10] sm:$0xff]
      %v1238 = vld [vmem:[%s7 + $0x18] sm:$0xff]
      %v1239 = vld [vmem:[%s7 + $0x20] sm:$0xff]
      %v1240 = vld [vmem:[%s7 + $0x28] sm:$0xff]
      %v1241 = vld [vmem:[%s7 + $0x30] sm:$0xff]
      %v1242 = vld [vmem:[%s7 + $0x38] sm:$0xff]
      %v1243 = vld [vmem:[%s7 + $0x40] sm:$0xff]
      %v1244 = vld [vmem:[%s7 + $0x48] sm:$0xff]
      %v1245 = vld [vmem:[%s7 + $0x50] sm:$0xff]
      %v1246 = vld [vmem:[%s7 + $0x58] sm:$0xff]
      %v1247 = vld [vmem:[%s7 + $0x60] sm:$0xff]
      %v1248 = vld [vmem:[%s7 + $0x68] sm:$0xff]
      %v1249 = vld [vmem:[%s7 + $0x70] sm:$0xff]
      %v1250 = vld [vmem:[%s7 + $0x78] sm:$0xff]
      %v1251 = vld [vmem:[%s8] sm:$0x1]
      %v1253 = vlaneseq
      %v1254 = vshrl.u32 %v1253, 7
      %v1255 = vsub.s32 0, %v1254
      %v1256 = vrot.slane %v1251, %v1255
      %1258 = vmatprep.subr.mxu0 0.0
      %1259 = vmatpush1.msra.mxu0 %v1250
      %1260 = vmatprep.subr.mxu0 0.0
      %1261 = vmatpush1.msra.mxu0 %v1249
      %1262 = vmatprep.subr.mxu0 0.0
      %1263 = vmatpush1.msra.mxu0 %v1248
      %1264 = vmatprep.subr.mxu0 0.0
      %1265 = vmatpush1.msra.mxu0 %v1247
      %1266 = vmatprep.subr.mxu0 0.0
      %1267 = vmatpush1.msra.mxu0 %v1246
      %1268 = vmatprep.subr.mxu0 0.0
      %1269 = vmatpush1.msra.mxu0 %v1245
      %1270 = vmatprep.subr.mxu0 0.0
      %1271 = vmatpush1.msra.mxu0 %v1244
      %1272 = vmatprep.subr.mxu0 0.0
      %1273 = vmatpush1.msra.mxu0 %v1243
      %1274 = vmatprep.subr.mxu0 0.0
      %1275 = vmatpush1.msra.mxu0 %v1242
      %1276 = vmatprep.subr.mxu0 0.0
      %1277 = vmatpush1.msra.mxu0 %v1241
      %1278 = vmatprep.subr.mxu0 0.0
      %1279 = vmatpush1.msra.mxu0 %v1240
      %1280 = vmatprep.subr.mxu0 0.0
      %1281 = vmatpush1.msra.mxu0 %v1239
      %1282 = vmatprep.subr.mxu0 0.0
      %1283 = vmatpush1.msra.mxu0 %v1238
      %1284 = vmatprep.subr.mxu0 0.0
      %1285 = vmatpush1.msra.mxu0 %v1237
      %1286 = vmatprep.subr.mxu0 0.0
      %1287 = vmatpush1.msra.mxu0 %v1236
      %1288 = vmatprep.subr.mxu0 0.0
      %1289 = vmatpush1.msra.mxu0 %v1235
      %1290 = vmatprep.subr.mxu0 0.0
      %1291 = vmatpush2.msra.mxu0 0.0
      %1292 = vmatprep.subr.mxu0 0.0
      %1293 = vmatpush2.msra.mxu0 0.0
      %1294 = vmatprep.subr.mxu0 0.0
      %1295 = vmatpush2.msra.mxu0 0.0
      %1296 = vmatprep.subr.mxu0 0.0
      %1297 = vmatpush2.msra.mxu0 0.0
      %1298 = vmatprep.subr.mxu0 0.0
      %1299 = vmatpush2.msra.mxu0 0.0
      %1300 = vmatprep.subr.mxu0 0.0
      %1301 = vmatpush2.msra.mxu0 0.0
      %1302 = vmatprep.subr.mxu0 0.0
      %1303 = vmatpush2.msra.mxu0 0.0
      %1304 = vmatprep.subr.mxu0 0.0
      %1305 = vmatpush2.msra.mxu0 0.0
      %1306 = vmatprep.subr.mxu0 0.0
      %1307 = vmatpush2.msra.mxu0 0.0
      %1308 = vmatprep.subr.mxu0 0.0
      %1309 = vmatpush2.msra.mxu0 0.0
      %1310 = vmatprep.subr.mxu0 0.0
      %1311 = vmatpush2.msra.mxu0 0.0
      %1312 = vmatprep.subr.mxu0 0.0
      %1313 = vmatpush2.msra.mxu0 0.0
      %1314 = vmatprep.subr.mxu0 0.0
      %1315 = vmatpush2.msra.mxu0 0.0
      %1316 = vmatprep.subr.mxu0 0.0
      %1317 = vmatpush2.msra.mxu0 0.0
      %1318 = vmatprep.subr.mxu0 0.0
      %1319 = vmatpush2.msra.mxu0 0.0
      %1320 = vmatprep.subr.mxu0 0.0
      %1321 = vmatpush2.msra.mxu0 0.0
      %1322 = vmatprep.mubr.f32.mxu0 0.0
      %1323 = vmatmul.mubr.f32.gmra.mxu0 %v1227
      %v1324 = vpop.f32.mrf.mxu0
      %v1325 = vadd.f32 %v1256, %v1324
      %v1326 = vpop.f32.mrf.mxu0
      %1327 = vmatprep.mubr.f32.mxu0 0.0
      %1328 = vmatmul.mubr.f32.gmra.mxu0 %v1228
      %v1329 = vpop.f32.mrf.mxu0
      %v1330 = vadd.f32 %v1256, %v1329
      %v1331 = vpop.f32.mrf.mxu0
      %1332 = vmatprep.mubr.f32.mxu0 0.0
      %1333 = vmatmul.mubr.f32.gmra.mxu0 %v1229
      %v1334 = vpop.f32.mrf.mxu0
      %v1335 = vadd.f32 %v1256, %v1334
      %v1336 = vpop.f32.mrf.mxu0
      %1337 = vmatprep.mubr.f32.mxu0 0.0
      %1338 = vmatmul.mubr.f32.gmra.mxu0 %v1230
      %v1339 = vpop.f32.mrf.mxu0
      %v1340 = vadd.f32 %v1256, %v1339
      %v1341 = vpop.f32.mrf.mxu0
      %1342 = vmatprep.mubr.f32.mxu0 0.0
      %1343 = vmatmul.mubr.f32.gmra.mxu0 %v1231
      %v1344 = vpop.f32.mrf.mxu0
      %v1345 = vadd.f32 %v1256, %v1344
      %v1346 = vpop.f32.mrf.mxu0
      %1347 = vmatprep.mubr.f32.mxu0 0.0
      %1348 = vmatmul.mubr.f32.gmra.mxu0 %v1232
      %v1349 = vpop.f32.mrf.mxu0
      %v1350 = vadd.f32 %v1256, %v1349
      %v1351 = vpop.f32.mrf.mxu0
      %1352 = vmatprep.mubr.f32.mxu0 0.0
      %1353 = vmatmul.mubr.f32.gmra.mxu0 %v1233
      %v1354 = vpop.f32.mrf.mxu0
      %v1355 = vadd.f32 %v1256, %v1354
      %v1356 = vpop.f32.mrf.mxu0
      %1357 = vmatprep.mubr.f32.mxu0 0.0
      %1358 = vmatmul.mubr.f32.gmra.mxu0 %v1234
      %v1359 = vpop.f32.mrf.mxu0
      %v1360 = vadd.f32 %v1256, %v1359
      %v1361 = vpop.f32.mrf.mxu0
      %1362 = vdwg.mxu0
      %v1363 = vxor.u32 %v1325, 2147483648
      %v1364 = vxor.u32 %v1330, 2147483648
      %v1365 = vxor.u32 %v1335, 2147483648
      %v1366 = vxor.u32 %v1340, 2147483648
      %v1367 = vxor.u32 %v1345, 2147483648
      %v1368 = vxor.u32 %v1350, 2147483648
      %v1369 = vxor.u32 %v1355, 2147483648
      %v1370 = vxor.u32 %v1360, 2147483648
      %v1371 = vmul.f32 %v1363, 1.442695
      %v1372 = vpow.pop %v1371
      %v1373 = vmul.f32 %v1364, 1.442695
      %v1374 = vpow.pop %v1373
      %v1375 = vmul.f32 %v1365, 1.442695
      %v1376 = vpow.pop %v1375
      %v1377 = vmul.f32 %v1366, 1.442695
      %v1378 = vpow.pop %v1377
      %v1379 = vmul.f32 %v1367, 1.442695
      %v1380 = vpow.pop %v1379
      %v1381 = vmul.f32 %v1368, 1.442695
      %v1382 = vpow.pop %v1381
      %v1383 = vmul.f32 %v1369, 1.442695
      %v1384 = vpow.pop %v1383
      %v1385 = vmul.f32 %v1370, 1.442695
      %v1386 = vpow.pop %v1385
      %v1387 = vadd.f32 %v1372, 1.0
      %v1388 = vadd.f32 %v1374, 1.0
      %v1389 = vadd.f32 %v1376, 1.0
      %v1390 = vadd.f32 %v1378, 1.0
      %v1391 = vadd.f32 %v1380, 1.0
      %v1392 = vadd.f32 %v1382, 1.0
      %v1393 = vadd.f32 %v1384, 1.0
      %v1394 = vadd.f32 %v1386, 1.0
      %v1395 = vrcp.pop %v1387
      %v1396 = vmul.f32 1.0, %v1395
      %v1397 = vrcp.pop %v1388
      %v1398 = vmul.f32 1.0, %v1397
      %v1399 = vrcp.pop %v1389
      %v1400 = vmul.f32 1.0, %v1399
      %v1401 = vrcp.pop %v1390
      %v1402 = vmul.f32 1.0, %v1401
      %v1403 = vrcp.pop %v1391
      %v1404 = vmul.f32 1.0, %v1403
      %v1405 = vrcp.pop %v1392
      %v1406 = vmul.f32 1.0, %v1405
      %v1407 = vrcp.pop %v1393
      %v1408 = vmul.f32 1.0, %v1407
      %v1409 = vrcp.pop %v1394
      %v1410 = vmul.f32 1.0, %v1409
      %v1411 = vmul.f32 %v1325, %v1396
      %v1412 = vmul.f32 %v1330, %v1398
      %v1413 = vmul.f32 %v1335, %v1400
      %v1414 = vmul.f32 %v1340, %v1402
      %v1415 = vmul.f32 %v1345, %v1404
      %v1416 = vmul.f32 %v1350, %v1406
      %v1417 = vmul.f32 %v1355, %v1408
      %v1418 = vmul.f32 %v1360, %v1410
      %v1419 = vld [vmem:[%s9] sm:$0xff]
      %v1420 = vld [vmem:[%s9 + $0x8] sm:$0xff]
      %v1421 = vld [vmem:[%s9 + $0x10] sm:$0xff]
      %v1422 = vld [vmem:[%s9 + $0x18] sm:$0xff]
      %v1423 = vld [vmem:[%s9 + $0x20] sm:$0xff]
      %v1424 = vld [vmem:[%s9 + $0x28] sm:$0xff]
      %v1425 = vld [vmem:[%s9 + $0x30] sm:$0xff]
      %v1426 = vld [vmem:[%s9 + $0x38] sm:$0xff]
      %v1427 = vld [vmem:[%s9 + $0x40] sm:$0xff]
      %v1428 = vld [vmem:[%s9 + $0x48] sm:$0xff]
      %v1429 = vld [vmem:[%s9 + $0x50] sm:$0xff]
      %v1430 = vld [vmem:[%s9 + $0x58] sm:$0xff]
      %v1431 = vld [vmem:[%s9 + $0x60] sm:$0xff]
      %v1432 = vld [vmem:[%s9 + $0x68] sm:$0xff]
      %v1433 = vld [vmem:[%s9 + $0x70] sm:$0xff]
      %v1434 = vld [vmem:[%s9 + $0x78] sm:$0xff]
      %v1435 = vld [vmem:[%s10] sm:$0x1]
      %v1437 = vlaneseq
      %v1438 = vshrl.u32 %v1437, 7
      %v1439 = vsub.s32 0, %v1438
      %v1440 = vrot.slane %v1435, %v1439
      %1442 = vmatprep.subr.mxu0 0.0
      %1443 = vmatpush1.msra.mxu0 %v1434
      %1444 = vmatprep.subr.mxu0 0.0
      %1445 = vmatpush1.msra.mxu0 %v1433
      %1446 = vmatprep.subr.mxu0 0.0
      %1447 = vmatpush1.msra.mxu0 %v1432
      %1448 = vmatprep.subr.mxu0 0.0
      %1449 = vmatpush1.msra.mxu0 %v1431
      %1450 = vmatprep.subr.mxu0 0.0
      %1451 = vmatpush1.msra.mxu0 %v1430
      %1452 = vmatprep.subr.mxu0 0.0
      %1453 = vmatpush1.msra.mxu0 %v1429
      %1454 = vmatprep.subr.mxu0 0.0
      %1455 = vmatpush1.msra.mxu0 %v1428
      %1456 = vmatprep.subr.mxu0 0.0
      %1457 = vmatpush1.msra.mxu0 %v1427
      %1458 = vmatprep.subr.mxu0 0.0
      %1459 = vmatpush1.msra.mxu0 %v1426
      %1460 = vmatprep.subr.mxu0 0.0
      %1461 = vmatpush1.msra.mxu0 %v1425
      %1462 = vmatprep.subr.mxu0 0.0
      %1463 = vmatpush1.msra.mxu0 %v1424
      %1464 = vmatprep.subr.mxu0 0.0
      %1465 = vmatpush1.msra.mxu0 %v1423
      %1466 = vmatprep.subr.mxu0 0.0
      %1467 = vmatpush1.msra.mxu0 %v1422
      %1468 = vmatprep.subr.mxu0 0.0
      %1469 = vmatpush1.msra.mxu0 %v1421
      %1470 = vmatprep.subr.mxu0 0.0
      %1471 = vmatpush1.msra.mxu0 %v1420
      %1472 = vmatprep.subr.mxu0 0.0
      %1473 = vmatpush1.msra.mxu0 %v1419
      %1474 = vmatprep.subr.mxu0 0.0
      %1475 = vmatpush2.msra.mxu0 0.0
      %1476 = vmatprep.subr.mxu0 0.0
      %1477 = vmatpush2.msra.mxu0 0.0
      %1478 = vmatprep.subr.mxu0 0.0
      %1479 = vmatpush2.msra.mxu0 0.0
      %1480 = vmatprep.subr.mxu0 0.0
      %1481 = vmatpush2.msra.mxu0 0.0
      %1482 = vmatprep.subr.mxu0 0.0
      %1483 = vmatpush2.msra.mxu0 0.0
      %1484 = vmatprep.subr.mxu0 0.0
      %1485 = vmatpush2.msra.mxu0 0.0
      %1486 = vmatprep.subr.mxu0 0.0
      %1487 = vmatpush2.msra.mxu0 0.0
      %1488 = vmatprep.subr.mxu0 0.0
      %1489 = vmatpush2.msra.mxu0 0.0
      %1490 = vmatprep.subr.mxu0 0.0
      %1491 = vmatpush2.msra.mxu0 0.0
      %1492 = vmatprep.subr.mxu0 0.0
      %1493 = vmatpush2.msra.mxu0 0.0
      %1494 = vmatprep.subr.mxu0 0.0
      %1495 = vmatpush2.msra.mxu0 0.0
      %1496 = vmatprep.subr.mxu0 0.0
      %1497 = vmatpush2.msra.mxu0 0.0
      %1498 = vmatprep.subr.mxu0 0.0
      %1499 = vmatpush2.msra.mxu0 0.0
      %1500 = vmatprep.subr.mxu0 0.0
      %1501 = vmatpush2.msra.mxu0 0.0
      %1502 = vmatprep.subr.mxu0 0.0
      %1503 = vmatpush2.msra.mxu0 0.0
      %1504 = vmatprep.subr.mxu0 0.0
      %1505 = vmatpush2.msra.mxu0 0.0
      %1506 = vmatprep.mubr.f32.mxu0 0.0
      %1507 = vmatmul.mubr.f32.gmra.mxu0 %v1411
      %v1508 = vpop.f32.mrf.mxu0
      %v1509 = vadd.f32 %v1440, %v1508
      %v1510 = vpop.f32.mrf.mxu0
      %1511 = vmatprep.mubr.f32.mxu0 0.0
      %1512 = vmatmul.mubr.f32.gmra.mxu0 %v1412
      %v1513 = vpop.f32.mrf.mxu0
      %v1514 = vadd.f32 %v1440, %v1513
      %v1515 = vpop.f32.mrf.mxu0
      %1516 = vmatprep.mubr.f32.mxu0 0.0
      %1517 = vmatmul.mubr.f32.gmra.mxu0 %v1413
      %v1518 = vpop.f32.mrf.mxu0
      %v1519 = vadd.f32 %v1440, %v1518
      %v1520 = vpop.f32.mrf.mxu0
      %1521 = vmatprep.mubr.f32.mxu0 0.0
      %1522 = vmatmul.mubr.f32.gmra.mxu0 %v1414
      %v1523 = vpop.f32.mrf.mxu0
      %v1524 = vadd.f32 %v1440, %v1523
      %v1525 = vpop.f32.mrf.mxu0
      %1526 = vmatprep.mubr.f32.mxu0 0.0
      %1527 = vmatmul.mubr.f32.gmra.mxu0 %v1415
      %v1528 = vpop.f32.mrf.mxu0
      %v1529 = vadd.f32 %v1440, %v1528
      %v1530 = vpop.f32.mrf.mxu0
      %1531 = vmatprep.mubr.f32.mxu0 0.0
      %1532 = vmatmul.mubr.f32.gmra.mxu0 %v1416
      %v1533 = vpop.f32.mrf.mxu0
      %v1534 = vadd.f32 %v1440, %v1533
      %v1535 = vpop.f32.mrf.mxu0
      %1536 = vmatprep.mubr.f32.mxu0 0.0
      %1537 = vmatmul.mubr.f32.gmra.mxu0 %v1417
      %v1538 = vpop.f32.mrf.mxu0
      %v1539 = vadd.f32 %v1440, %v1538
      %v1540 = vpop.f32.mrf.mxu0
      %1541 = vmatprep.mubr.f32.mxu0 0.0
      %1542 = vmatmul.mubr.f32.gmra.mxu0 %v1418
      %v1543 = vpop.f32.mrf.mxu0
      %v1544 = vadd.f32 %v1440, %v1543
      %v1545 = vpop.f32.mrf.mxu0
      %1546 = vdwg.mxu0
      %v1547 = vxor.u32 %v1509, 2147483648
      %v1548 = vxor.u32 %v1514, 2147483648
      %v1549 = vxor.u32 %v1519, 2147483648
      %v1550 = vxor.u32 %v1524, 2147483648
      %v1551 = vxor.u32 %v1529, 2147483648
      %v1552 = vxor.u32 %v1534, 2147483648
      %v1553 = vxor.u32 %v1539, 2147483648
      %v1554 = vxor.u32 %v1544, 2147483648
      %v1555 = vmul.f32 %v1547, 1.442695
      %v1556 = vpow.pop %v1555
      %v1557 = vmul.f32 %v1548, 1.442695
      %v1558 = vpow.pop %v1557
      %v1559 = vmul.f32 %v1549, 1.442695
      %v1560 = vpow.pop %v1559
      %v1561 = vmul.f32 %v1550, 1.442695
      %v1562 = vpow.pop %v1561
      %v1563 = vmul.f32 %v1551, 1.442695
      %v1564 = vpow.pop %v1563
      %v1565 = vmul.f32 %v1552, 1.442695
      %v1566 = vpow.pop %v1565
      %v1567 = vmul.f32 %v1553, 1.442695
      %v1568 = vpow.pop %v1567
      %v1569 = vmul.f32 %v1554, 1.442695
      %v1570 = vpow.pop %v1569
      %v1571 = vadd.f32 %v1556, 1.0
      %v1572 = vadd.f32 %v1558, 1.0
      %v1573 = vadd.f32 %v1560, 1.0
      %v1574 = vadd.f32 %v1562, 1.0
      %v1575 = vadd.f32 %v1564, 1.0
      %v1576 = vadd.f32 %v1566, 1.0
      %v1577 = vadd.f32 %v1568, 1.0
      %v1578 = vadd.f32 %v1570, 1.0
      %v1579 = vrcp.pop %v1571
      %v1580 = vmul.f32 1.0, %v1579
      %v1581 = vrcp.pop %v1572
      %v1582 = vmul.f32 1.0, %v1581
      %v1583 = vrcp.pop %v1573
      %v1584 = vmul.f32 1.0, %v1583
      %v1585 = vrcp.pop %v1574
      %v1586 = vmul.f32 1.0, %v1585
      %v1587 = vrcp.pop %v1575
      %v1588 = vmul.f32 1.0, %v1587
      %v1589 = vrcp.pop %v1576
      %v1590 = vmul.f32 1.0, %v1589
      %v1591 = vrcp.pop %v1577
      %v1592 = vmul.f32 1.0, %v1591
      %v1593 = vrcp.pop %v1578
      %v1594 = vmul.f32 1.0, %v1593
      %v1595 = vmul.f32 %v1509, %v1580
      %v1596 = vmul.f32 %v1514, %v1582
      %v1597 = vmul.f32 %v1519, %v1584
      %v1598 = vmul.f32 %v1524, %v1586
      %v1599 = vmul.f32 %v1529, %v1588
      %v1600 = vmul.f32 %v1534, %v1590
      %v1601 = vmul.f32 %v1539, %v1592
      %v1602 = vmul.f32 %v1544, %v1594
      %v1603 = vld [vmem:[%s11] sm:$0x1]
      %v1605 = vlaneseq
      %v1606 = vshrl.u32 %v1605, 7
      %v1607 = vsub.s32 0, %v1606
      %v1608 = vrot.slane %v1603, %v1607
      %v1610 = vmul.f32 %v1595, %v1608
      %v1611 = vmul.f32 %v1596, %v1608
      %v1612 = vmul.f32 %v1597, %v1608
      %v1613 = vmul.f32 %v1598, %v1608
      %v1614 = vmul.f32 %v1599, %v1608
      %v1615 = vmul.f32 %v1600, %v1608
      %v1616 = vmul.f32 %v1601, %v1608
      %v1617 = vmul.f32 %v1602, %v1608
      %1618 = vadd.xlane.f32.xlu0 %v1610
      %v1619 = vpop.xlane.xlu0 %1618
      %1620 = vadd.xlane.f32.xlu0 %v1611
      %v1621 = vpop.xlane.xlu0 %1620
      %1622 = vadd.xlane.f32.xlu0 %v1612
      %v1623 = vpop.xlane.xlu0 %1622
      %1624 = vadd.xlane.f32.xlu0 %v1613
      %v1625 = vpop.xlane.xlu0 %1624
      %1626 = vadd.xlane.f32.xlu0 %v1614
      %v1627 = vpop.xlane.xlu0 %1626
      %1628 = vadd.xlane.f32.xlu0 %v1615
      %v1629 = vpop.xlane.xlu0 %1628
      %1630 = vadd.xlane.f32.xlu0 %v1616
      %v1631 = vpop.xlane.xlu0 %1630
      %1632 = vadd.xlane.f32.xlu0 %v1617
      %v1633 = vpop.xlane.xlu0 %1632
      %v1634 = vsub.f32 0.0, %v953
      %v1635 = vsub.f32 0.0, %v954
      %v1636 = vsub.f32 0.0, %v955
      %v1637 = vsub.f32 0.0, %v956
      %v1638 = vsub.f32 0.0, %v957
      %v1639 = vsub.f32 0.0, %v958
      %v1640 = vsub.f32 0.0, %v959
      %v1641 = vsub.f32 0.0, %v960
      %v1642 = vmul.f32 %v1634, %v1619
      %v1643 = vmul.f32 %v1635, %v1621
      %v1644 = vmul.f32 %v1636, %v1623
      %v1645 = vmul.f32 %v1637, %v1625
      %v1646 = vmul.f32 %v1638, %v1627
      %v1647 = vmul.f32 %v1639, %v1629
      %v1648 = vmul.f32 %v1640, %v1631
      %v1649 = vmul.f32 %v1641, %v1633
      %v1650 = vsel %vm969, %v1642, 0.0
      %v1651 = vsel %vm969, %v1644, 0.0
      %v1652 = vadd.f32 %v1650, %v1651
      %v1653 = vsel %vm969, %v1646, 0.0
      %v1654 = vadd.f32 %v1652, %v1653
      %v1655 = vsel %vm969, %v1648, 0.0
      %v1656 = vadd.f32 %v1654, %v1655
      %v1657 = vsel %vm969, %v1643, 0.0
      %v1658 = vsel %vm969, %v1645, 0.0
      %v1659 = vadd.f32 %v1657, %v1658
      %v1660 = vsel %vm969, %v1647, 0.0
      %v1661 = vadd.f32 %v1659, %v1660
      %v1662 = vsel %vm969, %v1649, 0.0
      %v1663 = vadd.f32 %v1661, %v1662
      %v1664 = vmul.f32 %v1656, 0.25
      %v1665 = vmul.f32 %v1663, 0.25
      %v1666 = vadd.f32 %v614, %v1664
      %v1667 = vadd.f32 %v615, %v1665
      %1668 = vst.msk [vmem:[%s608] sm:$0xff] %vm969, %v1666
      %1669 = vst.msk [vmem:[%s608 + $0x8] sm:$0xff] %vm969, %v1667
      %v1670 = vadd.f32 %v1411, %v1413
      %v1671 = vadd.f32 %v1670, %v1415
      %v1672 = vadd.f32 %v1671, %v1417
      %v1673 = vadd.f32 %v1412, %v1414
      %v1674 = vadd.f32 %v1673, %v1416
      %v1675 = vadd.f32 %v1674, %v1418
      %v1676 = vmul.f32 %v1672, 0.25
      %v1677 = vmul.f32 %v1675, 0.25
      %v1678 = vld [vmem:[%s12] sm:$0xff]
      %v1679 = vld [vmem:[%s12 + $0x8] sm:$0xff]
      %v1680 = vld [vmem:[%s12 + $0x10] sm:$0xff]
      %v1681 = vld [vmem:[%s12 + $0x18] sm:$0xff]
      %v1682 = vld [vmem:[%s12 + $0x20] sm:$0xff]
      %v1683 = vld [vmem:[%s12 + $0x28] sm:$0xff]
      %v1684 = vld [vmem:[%s12 + $0x30] sm:$0xff]
      %v1685 = vld [vmem:[%s12 + $0x38] sm:$0xff]
      %v1686 = vld [vmem:[%s12 + $0x40] sm:$0xff]
      %v1687 = vld [vmem:[%s12 + $0x48] sm:$0xff]
      %v1688 = vld [vmem:[%s12 + $0x50] sm:$0xff]
      %v1689 = vld [vmem:[%s12 + $0x58] sm:$0xff]
      %v1690 = vld [vmem:[%s12 + $0x60] sm:$0xff]
      %v1691 = vld [vmem:[%s12 + $0x68] sm:$0xff]
      %v1692 = vld [vmem:[%s12 + $0x70] sm:$0xff]
      %v1693 = vld [vmem:[%s12 + $0x78] sm:$0xff]
      %v1694 = vld [vmem:[%s12 + $0x80] sm:$0xff]
      %v1695 = vld [vmem:[%s12 + $0x88] sm:$0xff]
      %v1696 = vld [vmem:[%s12 + $0x90] sm:$0xff]
      %v1697 = vld [vmem:[%s12 + $0x98] sm:$0xff]
      %v1698 = vld [vmem:[%s12 + $0xa0] sm:$0xff]
      %v1699 = vld [vmem:[%s12 + $0xa8] sm:$0xff]
      %v1700 = vld [vmem:[%s12 + $0xb0] sm:$0xff]
      %v1701 = vld [vmem:[%s12 + $0xb8] sm:$0xff]
      %v1702 = vld [vmem:[%s12 + $0xc0] sm:$0xff]
      %v1703 = vld [vmem:[%s12 + $0xc8] sm:$0xff]
      %v1704 = vld [vmem:[%s12 + $0xd0] sm:$0xff]
      %v1705 = vld [vmem:[%s12 + $0xd8] sm:$0xff]
      %v1706 = vld [vmem:[%s12 + $0xe0] sm:$0xff]
      %v1707 = vld [vmem:[%s12 + $0xe8] sm:$0xff]
      %v1708 = vld [vmem:[%s12 + $0xf0] sm:$0xff]
      %v1709 = vld [vmem:[%s12 + $0xf8] sm:$0xff]
      %v1710 = vld [vmem:[%s13] sm:$0x1]
      %v1712 = vlaneseq
      %v1713 = vshrl.u32 %v1712, 7
      %v1714 = vsub.s32 0, %v1713
      %v1715 = vrot.slane %v1710, %v1714
      %1717 = vmatprep.subr.mxu0 0.0
      %1718 = vmatpush1.msra.mxu0 %v1693
      %1719 = vmatprep.subr.mxu0 0.0
      %1720 = vmatpush1.msra.mxu0 %v1692
      %1721 = vmatprep.subr.mxu0 0.0
      %1722 = vmatpush1.msra.mxu0 %v1691
      %1723 = vmatprep.subr.mxu0 0.0
      %1724 = vmatpush1.msra.mxu0 %v1690
      %1725 = vmatprep.subr.mxu0 0.0
      %1726 = vmatpush1.msra.mxu0 %v1689
      %1727 = vmatprep.subr.mxu0 0.0
      %1728 = vmatpush1.msra.mxu0 %v1688
      %1729 = vmatprep.subr.mxu0 0.0
      %1730 = vmatpush1.msra.mxu0 %v1687
      %1731 = vmatprep.subr.mxu0 0.0
      %1732 = vmatpush1.msra.mxu0 %v1686
      %1733 = vmatprep.subr.mxu0 0.0
      %1734 = vmatpush1.msra.mxu0 %v1685
      %1735 = vmatprep.subr.mxu0 0.0
      %1736 = vmatpush1.msra.mxu0 %v1684
      %1737 = vmatprep.subr.mxu0 0.0
      %1738 = vmatpush1.msra.mxu0 %v1683
      %1739 = vmatprep.subr.mxu0 0.0
      %1740 = vmatpush1.msra.mxu0 %v1682
      %1741 = vmatprep.subr.mxu0 0.0
      %1742 = vmatpush1.msra.mxu0 %v1681
      %1743 = vmatprep.subr.mxu0 0.0
      %1744 = vmatpush1.msra.mxu0 %v1680
      %1745 = vmatprep.subr.mxu0 0.0
      %1746 = vmatpush1.msra.mxu0 %v1679
      %1747 = vmatprep.subr.mxu0 0.0
      %1748 = vmatpush1.msra.mxu0 %v1678
      %1749 = vmatprep.subr.mxu0 0.0
      %1750 = vmatpush2.msra.mxu0 %v1709
      %1751 = vmatprep.subr.mxu0 0.0
      %1752 = vmatpush2.msra.mxu0 %v1708
      %1753 = vmatprep.subr.mxu0 0.0
      %1754 = vmatpush2.msra.mxu0 %v1707
      %1755 = vmatprep.subr.mxu0 0.0
      %1756 = vmatpush2.msra.mxu0 %v1706
      %1757 = vmatprep.subr.mxu0 0.0
      %1758 = vmatpush2.msra.mxu0 %v1705
      %1759 = vmatprep.subr.mxu0 0.0
      %1760 = vmatpush2.msra.mxu0 %v1704
      %1761 = vmatprep.subr.mxu0 0.0
      %1762 = vmatpush2.msra.mxu0 %v1703
      %1763 = vmatprep.subr.mxu0 0.0
      %1764 = vmatpush2.msra.mxu0 %v1702
      %1765 = vmatprep.subr.mxu0 0.0
      %1766 = vmatpush2.msra.mxu0 %v1701
      %1767 = vmatprep.subr.mxu0 0.0
      %1768 = vmatpush2.msra.mxu0 %v1700
      %1769 = vmatprep.subr.mxu0 0.0
      %1770 = vmatpush2.msra.mxu0 %v1699
      %1771 = vmatprep.subr.mxu0 0.0
      %1772 = vmatpush2.msra.mxu0 %v1698
      %1773 = vmatprep.subr.mxu0 0.0
      %1774 = vmatpush2.msra.mxu0 %v1697
      %1775 = vmatprep.subr.mxu0 0.0
      %1776 = vmatpush2.msra.mxu0 %v1696
      %1777 = vmatprep.subr.mxu0 0.0
      %1778 = vmatpush2.msra.mxu0 %v1695
      %1779 = vmatprep.subr.mxu0 0.0
      %1780 = vmatpush2.msra.mxu0 %v1694
      %1781 = vmatprep.mubr.f32.mxu0 %v1676
      %1782 = vmatmul.mubr.f32.gmra.mxu0 %v612
      %v1783 = vpop.f32.mrf.mxu0
      %v1784 = vadd.f32 %v1715, %v1783
      %v1785 = vpop.f32.mrf.mxu0
      %1786 = vmatprep.mubr.f32.mxu0 %v1677
      %1787 = vmatmul.mubr.f32.gmra.mxu0 %v613
      %v1788 = vpop.f32.mrf.mxu0
      %v1789 = vadd.f32 %v1715, %v1788
      %v1790 = vpop.f32.mrf.mxu0
      %1791 = vdwg.mxu0
      %v1792 = vxor.u32 %v1784, 2147483648
      %v1793 = vxor.u32 %v1789, 2147483648
      %v1794 = vmul.f32 %v1792, 1.442695
      %v1795 = vpow.pop %v1794
      %v1796 = vmul.f32 %v1793, 1.442695
      %v1797 = vpow.pop %v1796
      %v1798 = vadd.f32 %v1795, 1.0
      %v1799 = vadd.f32 %v1797, 1.0
      %v1800 = vrcp.pop %v1798
      %v1801 = vmul.f32 1.0, %v1800
      %v1802 = vrcp.pop %v1799
      %v1803 = vmul.f32 1.0, %v1802
      %v1804 = vmul.f32 %v1784, %v1801
      %v1805 = vmul.f32 %v1789, %v1803
      %v1806 = vld [vmem:[%s14] sm:$0xff]
      %v1807 = vld [vmem:[%s14 + $0x8] sm:$0xff]
      %v1808 = vld [vmem:[%s14 + $0x10] sm:$0xff]
      %v1809 = vld [vmem:[%s14 + $0x18] sm:$0xff]
      %v1810 = vld [vmem:[%s14 + $0x20] sm:$0xff]
      %v1811 = vld [vmem:[%s14 + $0x28] sm:$0xff]
      %v1812 = vld [vmem:[%s14 + $0x30] sm:$0xff]
      %v1813 = vld [vmem:[%s14 + $0x38] sm:$0xff]
      %v1814 = vld [vmem:[%s14 + $0x40] sm:$0xff]
      %v1815 = vld [vmem:[%s14 + $0x48] sm:$0xff]
      %v1816 = vld [vmem:[%s14 + $0x50] sm:$0xff]
      %v1817 = vld [vmem:[%s14 + $0x58] sm:$0xff]
      %v1818 = vld [vmem:[%s14 + $0x60] sm:$0xff]
      %v1819 = vld [vmem:[%s14 + $0x68] sm:$0xff]
      %v1820 = vld [vmem:[%s14 + $0x70] sm:$0xff]
      %v1821 = vld [vmem:[%s14 + $0x78] sm:$0xff]
      %1822 = vmatprep.subr.mxu0 0.0
      %1823 = vmatpush1.msra.mxu0 %v1821
      %1824 = vmatprep.subr.mxu0 0.0
      %1825 = vmatpush1.msra.mxu0 %v1820
      %1826 = vmatprep.subr.mxu0 0.0
      %1827 = vmatpush1.msra.mxu0 %v1819
      %1828 = vmatprep.subr.mxu0 0.0
      %1829 = vmatpush1.msra.mxu0 %v1818
      %1830 = vmatprep.subr.mxu0 0.0
      %1831 = vmatpush1.msra.mxu0 %v1817
      %1832 = vmatprep.subr.mxu0 0.0
      %1833 = vmatpush1.msra.mxu0 %v1816
      %1834 = vmatprep.subr.mxu0 0.0
      %1835 = vmatpush1.msra.mxu0 %v1815
      %1836 = vmatprep.subr.mxu0 0.0
      %1837 = vmatpush1.msra.mxu0 %v1814
      %1838 = vmatprep.subr.mxu0 0.0
      %1839 = vmatpush1.msra.mxu0 %v1813
      %1840 = vmatprep.subr.mxu0 0.0
      %1841 = vmatpush1.msra.mxu0 %v1812
      %1842 = vmatprep.subr.mxu0 0.0
      %1843 = vmatpush1.msra.mxu0 %v1811
      %1844 = vmatprep.subr.mxu0 0.0
      %1845 = vmatpush1.msra.mxu0 %v1810
      %1846 = vmatprep.subr.mxu0 0.0
      %1847 = vmatpush1.msra.mxu0 %v1809
      %1848 = vmatprep.subr.mxu0 0.0
      %1849 = vmatpush1.msra.mxu0 %v1808
      %1850 = vmatprep.subr.mxu0 0.0
      %1851 = vmatpush1.msra.mxu0 %v1807
      %1852 = vmatprep.subr.mxu0 0.0
      %1853 = vmatpush1.msra.mxu0 %v1806
      %1854 = vmatprep.subr.mxu0 0.0
      %1855 = vmatpush2.msra.mxu0 0.0
      %1856 = vmatprep.subr.mxu0 0.0
      %1857 = vmatpush2.msra.mxu0 0.0
      %1858 = vmatprep.subr.mxu0 0.0
      %1859 = vmatpush2.msra.mxu0 0.0
      %1860 = vmatprep.subr.mxu0 0.0
      %1861 = vmatpush2.msra.mxu0 0.0
      %1862 = vmatprep.subr.mxu0 0.0
      %1863 = vmatpush2.msra.mxu0 0.0
      %1864 = vmatprep.subr.mxu0 0.0
      %1865 = vmatpush2.msra.mxu0 0.0
      %1866 = vmatprep.subr.mxu0 0.0
      %1867 = vmatpush2.msra.mxu0 0.0
      %1868 = vmatprep.subr.mxu0 0.0
      %1869 = vmatpush2.msra.mxu0 0.0
      %1870 = vmatprep.subr.mxu0 0.0
      %1871 = vmatpush2.msra.mxu0 0.0
      %1872 = vmatprep.subr.mxu0 0.0
      %1873 = vmatpush2.msra.mxu0 0.0
      %1874 = vmatprep.subr.mxu0 0.0
      %1875 = vmatpush2.msra.mxu0 0.0
      %1876 = vmatprep.subr.mxu0 0.0
      %1877 = vmatpush2.msra.mxu0 0.0
      %1878 = vmatprep.subr.mxu0 0.0
      %1879 = vmatpush2.msra.mxu0 0.0
      %1880 = vmatprep.subr.mxu0 0.0
      %1881 = vmatpush2.msra.mxu0 0.0
      %1882 = vmatprep.subr.mxu0 0.0
      %1883 = vmatpush2.msra.mxu0 0.0
      %1884 = vmatprep.subr.mxu0 0.0
      %1885 = vmatpush2.msra.mxu0 0.0
      %1886 = vmatprep.mubr.f32.mxu0 0.0
      %1887 = vmatmul.mubr.f32.gmra.mxu0 %v1804
      %v1888 = vpop.f32.mrf.mxu0
      %v1889 = vadd.f32 0.0, %v1888
      %v1890 = vpop.f32.mrf.mxu0
      %1891 = vmatprep.mubr.f32.mxu0 0.0
      %1892 = vmatmul.mubr.f32.gmra.mxu0 %v1805
      %v1893 = vpop.f32.mrf.mxu0
      %v1894 = vadd.f32 0.0, %v1893
      %v1895 = vpop.f32.mrf.mxu0
      %1896 = vdwg.mxu0
      %v1897 = vadd.f32 %v612, %v1889
      %v1898 = vadd.f32 %v613, %v1894
      %v1899 = vld [vmem:[%s15] sm:$0x1]
      %v1901 = vlaneseq
      %v1902 = vshrl.u32 %v1901, 7
      %v1903 = vsub.s32 0, %v1902
      %v1904 = vrot.slane %v1899, %v1903
      %v1906 = vadd.f32 %v1897, %v1904
      %v1907 = vadd.f32 %v1898, %v1904
      %1908 = vst [vmem:[%s602] sm:$0xff] %v1906
      %1909 = vst [vmem:[%s602 + $0x8] sm:$0xff] %v1907
      %s1910 = smul.u32 2, %s29
      %p1911 = scmp.lt.s32.totalorder %s1910, 7
      %s1912 = scalar_select %p1911, %s1910, 7
      %s1913 = smul.addr %s1912, 8
      %s1914 = scalar_lea.vmem %s16, %s1913
      %s1915 = smul.u32 2, %s29
      %p1916 = scmp.lt.s32.totalorder %s1915, 7
      %s1917 = scalar_select %p1916, %s1915, 7
      %s1918 = smul.addr %s1917, 8
      %s1919 = scalar_lea.vmem %s17, %s1918
      // Predicated region
      $region85: #{egcl_v2a_forward.1} parent=83 // pred_check
        %p1920 = pneg %p398
      $region86: #{egcl_v2a_forward.1} parent=83 // pred_check_branch
        %1922 = sbr.rel (%p1920) target = $region88
      $region87: #{egcl_v2a_forward.1} parent=83 // pred_region
        %s1923 = smul.u32 2, %s29
      $region88: #{egcl_v2a_forward.1} parent=83 // pred_fallthru
        _
      // Predicated region
      $region89: #{egcl_v2a_forward.1} parent=83 // pred_check
        %p1924 = pneg %p424
      $region90: #{egcl_v2a_forward.1} parent=83 // pred_check_branch
        %1926 = sbr.rel (%p1924) target = $region92
      $region91: #{egcl_v2a_forward.1} parent=83 // pred_region
        %s1927 = smul.u32 2, %s29
      $region92: #{egcl_v2a_forward.1} parent=83 // pred_fallthru
        _
    $region84: #{egcl_v2a_forward.1} parent=5 // pred_fallthru
      _
    %p1928 = scmp.le.s32.totalorder 2, %s24
    // Predicated region
    $region93: #{egcl_v2a_forward.1} parent=5 // pred_check
      %p1929 = pneg %p1928
    $region94: #{egcl_v2a_forward.1} parent=5 // pred_check_branch
      %1931 = sbr.rel (%p1929) target = $region96
    $region95: #{egcl_v2a_forward.1} parent=5 // pred_region
      %s1932 = ssub.s32 %s24, 2
      // Predicated region
      $region97: #{egcl_v2a_forward.1} parent=95 // pred_check
        %p1933 = pneg %p404
      $region98: #{egcl_v2a_forward.1} parent=95 // pred_check_branch
        %1935 = sbr.rel (%p1933) target = $region100
      $region99: #{egcl_v2a_forward.1} parent=95 // pred_region
        %s1936 = smul.u32 2, %s30
        %p1937 = scmp.lt.s32.totalorder %s1936, 7
        %s1938 = scalar_select %p1937, %s1936, 7
        %s1939 = smul.addr %s1938, 8
        %s1940 = scalar_lea.vmem %s16, %s1939
      $region100: #{egcl_v2a_forward.1} parent=95 // pred_fallthru
        _
      // Predicated region
      $region101: #{egcl_v2a_forward.1} parent=95 // pred_check
        %p1941 = pneg %p430
      $region102: #{egcl_v2a_forward.1} parent=95 // pred_check_branch
        %1943 = sbr.rel (%p1941) target = $region104
      $region103: #{egcl_v2a_forward.1} parent=95 // pred_region
        %s1944 = smul.u32 2, %s30
        %p1945 = scmp.lt.s32.totalorder %s1944, 7
        %s1946 = scalar_select %p1945, %s1944, 7
        %s1947 = smul.addr %s1946, 8
        %s1948 = scalar_lea.vmem %s17, %s1947
      $region104: #{egcl_v2a_forward.1} parent=95 // pred_fallthru
        _
    $region96: #{egcl_v2a_forward.1} parent=5 // pred_fallthru
      _
  $region6: #{egcl_v2a_forward.1} parent=0 // loop_footer
    %s28 = sadd.s32 1, %s24
  $region7: #{egcl_v2a_forward.1} parent=0 // loop_footer_branch
    %23 = sbr.rel target = $region3
  $region8: #{egcl_v2a_forward.1} parent=0 // loop_exit
    _

</llo_original>
